<compile_context>
chip_gen: v6e
topology: v6e:2x2x1
jax: 0.10.0
libtpu: 0.0.40
codegen_flags: <defaults>
</compile_context>

<pallas_src>
import math

import numpy as np
import jax
import jax.numpy as jnp
from jax import lax
from jax.experimental import pallas as pl
from jax.experimental.pallas import tpu as pltpu

NEG = -1e30  # finite "-inf" fill for masked max


# ----------------------------------------------------------------------------
# helpers
# ----------------------------------------------------------------------------
def _full_spec(shape):
    """BlockSpec covering the whole array (grid=(1,))."""
    nd = len(shape)
    return pl.BlockSpec(shape, lambda i, _nd=nd: (0,) * _nd)


# ----------------------------------------------------------------------------
# fused forward kernel
# ----------------------------------------------------------------------------
def _make_net_kernel(num_graphs, npg_pad, ks):
    """Build the fused forward kernel.  `ks` are the static per-stage keep counts."""
    k1, k2, k3 = ks

    def kernel(a_ref, x_ref, alive_ref, sg_ref,
               w1_ref, b1_ref, w2_ref, b2_ref, w3_ref, b3_ref,
               p1_ref, p2_ref, p3_ref,
               wl1_ref, bl1_ref, wl2_ref, bl2_ref, wl3_ref, bl3_ref,
               o_ref):
        f32, bf16 = jnp.float32, jnp.bfloat16
        npad = a_ref.shape[0]

        # shared constants (built once, reused by all three stages)
        row_i = lax.broadcasted_iota(jnp.int32, (npad, npad), 0)
        col_j = lax.broadcasted_iota(jnp.int32, (npad, npad), 1)
        eye = (row_i == col_j).astype(f32)
        lower_b = col_j < row_i          # tie-break: the smaller index wins
        sg = sg_ref[...]                 # same-graph mask over real nodes

        def to_row(v_col):
            # (npad,1) column -> (1,npad) row without a transpose:
            # sum_i eye[i, j] * v[i] == v[j]   (exact, one sublane reduce)
            return jnp.sum(eye * v_col, axis=0, keepdims=True)

        def gcn_relu(adj, h, w_ref, b_ref):
            # relu( D^-1/2 (A + I) D^-1/2 (h @ W) + b ); self-loops added
            # analytically, so no identity matrix is ever materialized.
            deg = jnp.sum(adj, axis=1, keepdims=True) + 1.0
            d = lax.rsqrt(deg)                                      # (npad,1) f32
            hw = jnp.dot(h.astype(bf16), w_ref[...].astype(bf16),
                         preferred_element_type=f32)                # MXU, f32 acc
            agg = jnp.dot(adj.astype(bf16), (d * hw).astype(bf16),
                          preferred_element_type=f32)
            return jnp.maximum(d * agg + (d * d) * hw + b_ref[...], 0.0)

        def pool_readout(h, adj, alive, p_ref, k):
            # TopKPooling(ratio) as a static-shape keep mask + score gating,
            # followed by the [global_max_pool ; global_mean_pool] readout.
            score = jnp.tanh(jnp.dot(h, p_ref[...],
                                     preferred_element_type=f32))   # (npad,1)
            s_eff = jnp.where(alive, score, NEG)
            s_row = to_row(s_eff)                                   # (1,npad)
            beats = (s_row > s_eff) | ((s_row == s_eff) & lower_b)  # (npad,npad)
            rank = jnp.sum(jnp.where(beats, sg, 0.0), axis=1, keepdims=True)
            kept_b = (rank < float(k)) & alive                      # (npad,1) bool
            kept = jnp.where(kept_b, 1.0, 0.0)
            hg = h * score * kept                                   # gated features
            adj_next = adj * kept * to_row(kept)                    # drop rows+cols
            # Readout: each graph owns one contiguous npg_pad-row slab, so the
            # per-graph max / mean are plain vectorized sublane reductions that
            # stay in vregs — the kernel stores only the final logits.
            hmask = jnp.where(kept_b, hg, NEG)
            reads = []
            for g in range(num_graphs):                             # unrolled, B=2
                sl = slice(g * npg_pad, (g + 1) * npg_pad)
                gmax = jnp.max(hmask[sl, :], axis=0, keepdims=True)
                gmean = jnp.sum(hg[sl, :], axis=0, keepdims=True) * (1.0 / k)
                reads.append(jnp.concatenate([gmax, gmean], axis=1))
            return hg, adj_next, kept_b, jnp.concatenate(reads, axis=0)

        adj0 = a_ref[...]
        alive0 = alive_ref[...] > 0.5

        h = gcn_relu(adj0, x_ref[...], w1_ref, b1_ref)
        h, adj1, kept1, x1 = pool_readout(h, adj0, alive0, p1_ref, k1)

        h = gcn_relu(adj1, h, w2_ref, b2_ref)
        h, adj2, kept2, x2 = pool_readout(h, adj1, kept1, p2_ref, k2)

        h = gcn_relu(adj2, h, w3_ref, b3_ref)
        h, _, _, x3 = pool_readout(h, adj2, kept2, p3_ref, k3)

        xcat = x1 + x2 + x3                                         # (B, 256)

        hl = jnp.dot(xcat.astype(bf16), wl1_ref[...].astype(bf16),
                     preferred_element_type=f32) + bl1_ref[...]
        hl = jnp.maximum(hl, 0.0)                                   # act1 = ReLU
        hl = jnp.dot(hl.astype(bf16), wl2_ref[...].astype(bf16),
                     preferred_element_type=f32) + bl2_ref[...]
        hl = jnp.maximum(hl, 0.0)                                   # act2 = ReLU
        # TODO(synk): F.dropout(p=0.5) omitted — kernel implements eval() mode.
        z = jnp.dot(hl.astype(bf16), wl3_ref[...].astype(bf16),
                    preferred_element_type=f32) + bl3_ref[...]
        o_ref[...] = 1.0 / (1.0 + jnp.exp(-z))                      # sigmoid (f32)

    return kernel


def net_forward_fn(num_graphs, nodes_per_graph, npg_pad, action_size, ratio=0.8):
    """Return a jitted forward(A0, x0, alive0, sg, params) -> (B, action_size)."""
    k1 = int(math.ceil(ratio * nodes_per_graph))
    k2 = int(math.ceil(ratio * k1))
    k3 = int(math.ceil(ratio * k2))
    kernel = _make_net_kernel(num_graphs, npg_pad, (k1, k2, k3))

    def fwd(A0, x0, alive0, sg, p):
        action_pad = p["w_l3"].shape[1]
        args = (A0, x0, alive0, sg,
                p["w_c1"], p["b_c1"], p["w_c2"], p["b_c2"], p["w_c3"], p["b_c3"],
                p["p1"], p["p2"], p["p3"],
                p["w_l1"], p["b_l1"], p["w_l2"], p["b_l2"], p["w_l3"], p["b_l3"])
        out = pl.pallas_call(
            kernel,
            grid=(1,),
            in_specs=[_full_spec(a.shape) for a in args],
            out_specs=_full_spec((num_graphs, action_pad)),
            out_shape=jax.ShapeDtypeStruct((num_graphs, action_pad), jnp.float32),
            compiler_params=pltpu.CompilerParams(
                dimension_semantics=("arbitrary",)),
        )(*args)
        # drop the lane padding of the classifier (124 real actions);
        # torch's .squeeze(1) is a no-op at this width.
        return out[:, :action_size]

    return jax.jit(fwd)


# ----------------------------------------------------------------------------
# one-time parameter preparation (padding / reshaping, runs once in XLA)
# ----------------------------------------------------------------------------
def prepare_params(params, feat_pad, action_pad):
    def row(v):                      # bias as (1, C)
        return v.reshape(1, -1).astype(jnp.float32)

    def pnorm(v):                    # TopKPooling projection, pre-normalized, (C, 1)
        return (v / jnp.linalg.norm(v)).reshape(-1, 1).astype(jnp.float32)

    c_in = params["w_c1"].shape[0]
    w_c1 = jnp.zeros((feat_pad, params["w_c1"].shape[1]), jnp.float32)
    w_c1 = w_c1.at[:c_in, :].set(params["w_c1"])

    act = params["w_l3"].shape[1]
    w_l3 = jnp.zeros((params["w_l3"].shape[0], action_pad), jnp.float32)
    w_l3 = w_l3.at[:, :act].set(params["w_l3"])
    b_l3 = jnp.zeros((1, action_pad), jnp.float32).at[0, :act].set(params["b_l3"])

    return dict(
        w_c1=w_c1, b_c1=row(params["b_c1"]),
        w_c2=params["w_c2"], b_c2=row(params["b_c2"]),
        w_c3=params["w_c3"], b_c3=row(params["b_c3"]),
        p1=pnorm(params["p1"]), p2=pnorm(params["p2"]), p3=pnorm(params["p3"]),
        w_l1=params["w_l1"], b_l1=row(params["b_l1"]),
        w_l2=params["w_l2"], b_l2=row(params["b_l2"]),
        w_l3=w_l3, b_l3=b_l3,
    )


def init_params(key):
    ks = jax.random.split(key, 12)

    def w(k, shape, scale=0.1):
        return (scale * jax.random.normal(k, shape)).astype(jnp.float32)

    return dict(
        # GCNConv(4, 128), GCNConv(128, 128) x2
        w_c1=w(ks[0], (4, 128)), b_c1=jnp.zeros((128,), jnp.float32),
        w_c2=w(ks[1], (128, 128)), b_c2=jnp.zeros((128,), jnp.float32),
        w_c3=w(ks[2], (128, 128)), b_c3=jnp.zeros((128,), jnp.float32),
        # TopKPooling projection vectors
        p1=w(ks[3], (128,)), p2=w(ks[4], (128,)), p3=w(ks[5], (128,)),
        # MLP head
        w_l1=w(ks[6], (256, 128)), b_l1=w(ks[7], (128,), 0.01),
        w_l2=w(ks[8], (128, 64)), b_l2=w(ks[9], (64,), 0.01),
        w_l3=w(ks[10], (64, 124)), b_l3=w(ks[11], (124,), 0.01),
    )


# ----------------------------------------------------------------------------
# demo
# ----------------------------------------------------------------------------
if __name__ == "__main__":
    NUM_GRAPHS = 2         # batch of 2 equal-sized graphs
    NODES_PER_GRAPH = 10   # static -> k1=8, k2=7, k3=6 after the 0.8 poolings
    NPG_PAD = 16           # per-graph row slab (multiple of 8 sublanes)
    NPAD = NUM_GRAPHS * NPG_PAD
    FEAT_DIM = 4           # ['block', 'function', 'type', 'text_idx']
    FEAT_PAD = 8
    ACTION_SIZE = 124
    ACTION_PAD = 128

    key = jax.random.PRNGKey(0)
    k_feat, k_params = jax.random.split(key)

    # integer-valued node attributes, cast to float (matches data_pyg.x.float())
    feats = np.asarray(
        jax.random.randint(k_feat, (NUM_GRAPHS, NODES_PER_GRAPH, FEAT_DIM), 0, 10),
        dtype=np.float32)

    x_np = np.zeros((NPAD, FEAT_PAD), np.float32)
    alive_np = np.zeros((NPAD, 1), np.float32)
    sg_np = np.zeros((NPAD, NPAD), np.float32)
    A_np = np.zeros((NPAD, NPAD), np.float32)
    for g in range(NUM_GRAPHS):
        off = g * NPG_PAD
        x_np[off:off + NODES_PER_GRAPH, :FEAT_DIM] = feats[g]
        alive_np[off:off + NODES_PER_GRAPH, 0] = 1.0
        sg_np[off:off + NODES_PER_GRAPH, off:off + NODES_PER_GRAPH] = 1.0
        # deterministic directed graph: per-graph ring + chord edges
        for i in range(NODES_PER_GRAPH):
            for dst in ((i + 1) % NODES_PER_GRAPH, (i + 3) % NODES_PER_GRAPH):
                A_np[off + dst, off + i] = 1.0        # A[target, source]

    A0 = jnp.asarray(A_np)
    x0 = jnp.asarray(x_np)
    alive0 = jnp.asarray(alive_np)
    sg = jnp.asarray(sg_np)

    params = init_params(k_params)
    prep = prepare_params(params, FEAT_PAD, ACTION_PAD)

    fwd = net_forward_fn(NUM_GRAPHS, NODES_PER_GRAPH, NPG_PAD, ACTION_SIZE)
    out = jax.block_until_ready(fwd(A0, x0, alive0, sg, prep))

    assert out.shape == (NUM_GRAPHS, ACTION_SIZE), out.shape
    assert bool(jnp.all(jnp.isfinite(out)))
    assert bool(jnp.all((out >= 0.0) & (out <= 1.0)))
    print("KERNEL_OK")
</pallas_src>

<mosaic_0001>
module attributes {stable_mosaic.version = 11 : i64} {
  func.func @kernel(%arg0: i32, %arg1: memref<32x32xf32, #tpu.memory_space<vmem>>, %arg2: memref<32x8xf32, #tpu.memory_space<vmem>>, %arg3: memref<32x1xf32, #tpu.memory_space<vmem>>, %arg4: memref<32x32xf32, #tpu.memory_space<vmem>>, %arg5: memref<8x128xf32, #tpu.memory_space<vmem>>, %arg6: memref<1x128xf32, #tpu.memory_space<vmem>>, %arg7: memref<128x128xf32, #tpu.memory_space<vmem>>, %arg8: memref<1x128xf32, #tpu.memory_space<vmem>>, %arg9: memref<128x128xf32, #tpu.memory_space<vmem>>, %arg10: memref<1x128xf32, #tpu.memory_space<vmem>>, %arg11: memref<128x1xf32, #tpu.memory_space<vmem>>, %arg12: memref<128x1xf32, #tpu.memory_space<vmem>>, %arg13: memref<128x1xf32, #tpu.memory_space<vmem>>, %arg14: memref<256x128xf32, #tpu.memory_space<vmem>>, %arg15: memref<1x128xf32, #tpu.memory_space<vmem>>, %arg16: memref<128x64xf32, #tpu.memory_space<vmem>>, %arg17: memref<1x64xf32, #tpu.memory_space<vmem>>, %arg18: memref<64x128xf32, #tpu.memory_space<vmem>>, %arg19: memref<1x128xf32, #tpu.memory_space<vmem>>, %arg20: memref<2x128xf32, #tpu.memory_space<vmem>>) attributes {dimension_semantics = [#tpu.dimension_semantics<arbitrary>], iteration_bounds = array<i64: 1>, scalar_prefetch = 0 : i64, scratch_operands = 0 : i64, tpu.core_type = #tpu.core_type<tc>, window_params = [{pipeline_mode = #tpu.pipeline_mode<synchronous>, transform_indices = @transform_0, window_bounds = array<i64: 32, 32>}, {pipeline_mode = #tpu.pipeline_mode<synchronous>, transform_indices = @transform_1, window_bounds = array<i64: 32, 8>}, {pipeline_mode = #tpu.pipeline_mode<synchronous>, transform_indices = @transform_2, window_bounds = array<i64: 32, 1>}, {pipeline_mode = #tpu.pipeline_mode<synchronous>, transform_indices = @transform_3, window_bounds = array<i64: 32, 32>}, {pipeline_mode = #tpu.pipeline_mode<synchronous>, transform_indices = @transform_4, window_bounds = array<i64: 8, 128>}, {pipeline_mode = #tpu.pipeline_mode<synchronous>, transform_indices = @transform_5, window_bounds = array<i64: 1, 128>}, {pipeline_mode = #tpu.pipeline_mode<synchronous>, transform_indices = @transform_6, window_bounds = array<i64: 128, 128>}, {pipeline_mode = #tpu.pipeline_mode<synchronous>, transform_indices = @transform_7, window_bounds = array<i64: 1, 128>}, {pipeline_mode = #tpu.pipeline_mode<synchronous>, transform_indices = @transform_8, window_bounds = array<i64: 128, 128>}, {pipeline_mode = #tpu.pipeline_mode<synchronous>, transform_indices = @transform_9, window_bounds = array<i64: 1, 128>}, {pipeline_mode = #tpu.pipeline_mode<synchronous>, transform_indices = @transform_10, window_bounds = array<i64: 128, 1>}, {pipeline_mode = #tpu.pipeline_mode<synchronous>, transform_indices = @transform_11, window_bounds = array<i64: 128, 1>}, {pipeline_mode = #tpu.pipeline_mode<synchronous>, transform_indices = @transform_12, window_bounds = array<i64: 128, 1>}, {pipeline_mode = #tpu.pipeline_mode<synchronous>, transform_indices = @transform_13, window_bounds = array<i64: 256, 128>}, {pipeline_mode = #tpu.pipeline_mode<synchronous>, transform_indices = @transform_14, window_bounds = array<i64: 1, 128>}, {pipeline_mode = #tpu.pipeline_mode<synchronous>, transform_indices = @transform_15, window_bounds = array<i64: 128, 64>}, {pipeline_mode = #tpu.pipeline_mode<synchronous>, transform_indices = @transform_16, window_bounds = array<i64: 1, 64>}, {pipeline_mode = #tpu.pipeline_mode<synchronous>, transform_indices = @transform_17, window_bounds = array<i64: 64, 128>}, {pipeline_mode = #tpu.pipeline_mode<synchronous>, transform_indices = @transform_18, window_bounds = array<i64: 1, 128>}, {pipeline_mode = #tpu.pipeline_mode<synchronous>, transform_indices = @transform_19, window_bounds = array<i64: 2, 128>}]} {
    %0 = tpu.iota {dimensions = array<i32: 0>} : vector<32x32xi32>
    %1 = tpu.iota {dimensions = array<i32: 1>} : vector<32x32xi32>
    %2 = arith.cmpi eq, %0, %1 : vector<32x32xi32>
    %3 = arith.extui %2 : vector<32x32xi1> to vector<32x32xi32>
    %4 = arith.sitofp %3 : vector<32x32xi32> to vector<32x32xf32>
    %5 = arith.cmpi slt, %1, %0 : vector<32x32xi32>
    %c0 = arith.constant 0 : index
    %c0_0 = arith.constant 0 : index
    %6 = vector.load %arg4[%c0, %c0_0] : memref<32x32xf32, #tpu.memory_space<vmem>>, vector<32x32xf32>
    %c0_1 = arith.constant 0 : index
    %c0_2 = arith.constant 0 : index
    %7 = vector.load %arg1[%c0_1, %c0_2] : memref<32x32xf32, #tpu.memory_space<vmem>>, vector<32x32xf32>
    %c0_3 = arith.constant 0 : index
    %c0_4 = arith.constant 0 : index
    %8 = vector.load %arg3[%c0_3, %c0_4] : memref<32x1xf32, #tpu.memory_space<vmem>>, vector<32x1xf32>
    %cst = arith.constant 5.000000e-01 : f32
    %9 = vector.broadcast %cst : f32 to vector<32x1xf32>
    %10 = arith.cmpf ogt, %8, %9 : vector<32x1xf32>
    %c0_5 = arith.constant 0 : index
    %c0_6 = arith.constant 0 : index
    %11 = vector.load %arg2[%c0_5, %c0_6] : memref<32x8xf32, #tpu.memory_space<vmem>>, vector<32x8xf32>
    %cst_7 = arith.constant dense<0.000000e+00> : vector<32xf32>
    %12 = vector.multi_reduction <add>, %7, %cst_7 [1] : vector<32x32xf32> to vector<32xf32>
    %13 = vector.shape_cast %12 : vector<32xf32> to vector<32x1xf32>
    %cst_8 = arith.constant 1.000000e+00 : f32
    %14 = vector.broadcast %cst_8 : f32 to vector<32x1xf32>
    %15 = arith.addf %13, %14 : vector<32x1xf32>
    %16 = math.rsqrt %15 : vector<32x1xf32>
    %17 = arith.truncf %11 : vector<32x8xf32> to vector<32x8xbf16>
    %c0_9 = arith.constant 0 : index
    %c0_10 = arith.constant 0 : index
    %18 = vector.load %arg5[%c0_9, %c0_10] : memref<8x128xf32, #tpu.memory_space<vmem>>, vector<8x128xf32>
    %19 = arith.truncf %18 : vector<8x128xf32> to vector<8x128xbf16>
    %cst_11 = arith.constant dense<0.000000e+00> : vector<32x128xf32>
    %20 = tpu.matmul %17, %19, %cst_11 {dimension_numbers = #tpu.dot_dimension_numbers<[1], [0], [0], [1], [0, 0, 1, 1], [], []>} : vector<32x8xbf16>, vector<8x128xbf16>, vector<32x128xf32> -> vector<32x128xf32>
    %21 = arith.truncf %7 : vector<32x32xf32> to vector<32x32xbf16>
    %22 = vector.broadcast %16 : vector<32x1xf32> to vector<32x128xf32>
    %23 = arith.mulf %22, %20 : vector<32x128xf32>
    %24 = arith.truncf %23 : vector<32x128xf32> to vector<32x128xbf16>
    %cst_12 = arith.constant dense<0.000000e+00> : vector<32x128xf32>
    %25 = tpu.matmul %21, %24, %cst_12 {dimension_numbers = #tpu.dot_dimension_numbers<[1], [0], [0], [1], [0, 0, 1, 1], [], []>} : vector<32x32xbf16>, vector<32x128xbf16>, vector<32x128xf32> -> vector<32x128xf32>
    %26 = vector.broadcast %16 : vector<32x1xf32> to vector<32x128xf32>
    %27 = arith.mulf %26, %25 : vector<32x128xf32>
    %28 = arith.mulf %16, %16 : vector<32x1xf32>
    %29 = vector.broadcast %28 : vector<32x1xf32> to vector<32x128xf32>
    %30 = arith.mulf %29, %20 : vector<32x128xf32>
    %31 = arith.addf %27, %30 : vector<32x128xf32>
    %c0_13 = arith.constant 0 : index
    %c0_14 = arith.constant 0 : index
    %32 = vector.load %arg6[%c0_13, %c0_14] : memref<1x128xf32, #tpu.memory_space<vmem>>, vector<1x128xf32>
    %33 = vector.broadcast %32 : vector<1x128xf32> to vector<32x128xf32>
    %34 = arith.addf %31, %33 : vector<32x128xf32>
    %cst_15 = arith.constant 0.000000e+00 : f32
    %35 = vector.broadcast %cst_15 : f32 to vector<32x128xf32>
    %36 = arith.maximumf %34, %35 : vector<32x128xf32>
    %c0_16 = arith.constant 0 : index
    %c0_17 = arith.constant 0 : index
    %37 = vector.load %arg11[%c0_16, %c0_17] : memref<128x1xf32, #tpu.memory_space<vmem>>, vector<128x1xf32>
    %cst_18 = arith.constant dense<0.000000e+00> : vector<32x1xf32>
    %38 = tpu.matmul %36, %37, %cst_18 {dimension_numbers = #tpu.dot_dimension_numbers<[1], [0], [0], [1], [0, 0, 1, 1], [], []>} : vector<32x128xf32>, vector<128x1xf32>, vector<32x1xf32> -> vector<32x1xf32>
    %39 = math.tanh %38 : vector<32x1xf32>
    %cst_19 = arith.constant -1.000000e+30 : f32
    %40 = vector.broadcast %cst_19 : f32 to vector<32x1xf32>
    %41 = arith.select %10, %39, %40 : vector<32x1xi1>, vector<32x1xf32>
    %42 = vector.broadcast %41 : vector<32x1xf32> to vector<32x32xf32>
    %43 = arith.mulf %4, %42 : vector<32x32xf32>
    %cst_20 = arith.constant dense<0.000000e+00> : vector<32xf32>
    %44 = vector.multi_reduction <add>, %43, %cst_20 [0] : vector<32x32xf32> to vector<32xf32>
    %45 = vector.shape_cast %44 : vector<32xf32> to vector<1x32xf32>
    %46 = vector.broadcast %45 : vector<1x32xf32> to vector<32x32xf32>
    %47 = vector.broadcast %41 : vector<32x1xf32> to vector<32x32xf32>
    %48 = arith.cmpf ogt, %46, %47 : vector<32x32xf32>
    %49 = vector.broadcast %45 : vector<1x32xf32> to vector<32x32xf32>
    %50 = vector.broadcast %41 : vector<32x1xf32> to vector<32x32xf32>
    %51 = arith.cmpf oeq, %49, %50 : vector<32x32xf32>
    %52 = arith.andi %51, %5 : vector<32x32xi1>
    %53 = arith.ori %48, %52 : vector<32x32xi1>
    %cst_21 = arith.constant 0.000000e+00 : f32
    %54 = vector.broadcast %cst_21 : f32 to vector<32x32xf32>
    %55 = arith.select %53, %6, %54 : vector<32x32xi1>, vector<32x32xf32>
    %cst_22 = arith.constant dense<0.000000e+00> : vector<32xf32>
    %56 = vector.multi_reduction <add>, %55, %cst_22 [1] : vector<32x32xf32> to vector<32xf32>
    %57 = vector.shape_cast %56 : vector<32xf32> to vector<32x1xf32>
    %cst_23 = arith.constant 8.000000e+00 : f32
    %58 = vector.broadcast %cst_23 : f32 to vector<32x1xf32>
    %59 = arith.cmpf olt, %57, %58 : vector<32x1xf32>
    %60 = arith.andi %59, %10 : vector<32x1xi1>
    %cst_24 = arith.constant 1.000000e+00 : f32
    %cst_25 = arith.constant 0.000000e+00 : f32
    %61 = vector.broadcast %cst_24 : f32 to vector<32x1xf32>
    %62 = vector.broadcast %cst_25 : f32 to vector<32x1xf32>
    %63 = arith.select %60, %61, %62 : vector<32x1xi1>, vector<32x1xf32>
    %64 = vector.broadcast %39 : vector<32x1xf32> to vector<32x128xf32>
    %65 = arith.mulf %36, %64 : vector<32x128xf32>
    %66 = vector.broadcast %63 : vector<32x1xf32> to vector<32x128xf32>
    %67 = arith.mulf %65, %66 : vector<32x128xf32>
    %68 = vector.broadcast %63 : vector<32x1xf32> to vector<32x32xf32>
    %69 = arith.mulf %7, %68 : vector<32x32xf32>
    %70 = vector.broadcast %63 : vector<32x1xf32> to vector<32x32xf32>
    %71 = arith.mulf %4, %70 : vector<32x32xf32>
    %cst_26 = arith.constant dense<0.000000e+00> : vector<32xf32>
    %72 = vector.multi_reduction <add>, %71, %cst_26 [0] : vector<32x32xf32> to vector<32xf32>
    %73 = vector.shape_cast %72 : vector<32xf32> to vector<1x32xf32>
    %74 = vector.broadcast %73 : vector<1x32xf32> to vector<32x32xf32>
    %75 = arith.mulf %69, %74 : vector<32x32xf32>
    %cst_27 = arith.constant -1.000000e+30 : f32
    %76 = vector.shape_cast %60 : vector<32x1xi1> to vector<32x1xi1>
    %77 = vector.broadcast %76 : vector<32x1xi1> to vector<32x128xi1>
    %78 = vector.broadcast %cst_27 : f32 to vector<32x128xf32>
    %79 = arith.select %77, %67, %78 : vector<32x128xi1>, vector<32x128xf32>
    %80 = vector.extract_strided_slice %79 {offsets = [0, 0], sizes = [16, 128], strides = [1, 1]} : vector<32x128xf32> to vector<16x128xf32>
    %cst_28 = arith.constant dense<0xFF800000> : vector<128xf32>
    %81 = vector.multi_reduction <maximumf>, %80, %cst_28 [0] : vector<16x128xf32> to vector<128xf32>
    %82 = vector.shape_cast %81 : vector<128xf32> to vector<1x128xf32>
    %83 = vector.extract_strided_slice %67 {offsets = [0, 0], sizes = [16, 128], strides = [1, 1]} : vector<32x128xf32> to vector<16x128xf32>
    %cst_29 = arith.constant dense<0.000000e+00> : vector<128xf32>
    %84 = vector.multi_reduction <add>, %83, %cst_29 [0] : vector<16x128xf32> to vector<128xf32>
    %85 = vector.shape_cast %84 : vector<128xf32> to vector<1x128xf32>
    %cst_30 = arith.constant 1.250000e-01 : f32
    %86 = vector.broadcast %cst_30 : f32 to vector<1x128xf32>
    %87 = arith.mulf %85, %86 : vector<1x128xf32>
    %88 = tpu.concatenate %82, %87 in 1 : vector<1x128xf32>, vector<1x128xf32> -> vector<1x256xf32>
    %89 = vector.extract_strided_slice %79 {offsets = [16, 0], sizes = [16, 128], strides = [1, 1]} : vector<32x128xf32> to vector<16x128xf32>
    %cst_31 = arith.constant dense<0xFF800000> : vector<128xf32>
    %90 = vector.multi_reduction <maximumf>, %89, %cst_31 [0] : vector<16x128xf32> to vector<128xf32>
    %91 = vector.shape_cast %90 : vector<128xf32> to vector<1x128xf32>
    %92 = vector.extract_strided_slice %67 {offsets = [16, 0], sizes = [16, 128], strides = [1, 1]} : vector<32x128xf32> to vector<16x128xf32>
    %cst_32 = arith.constant dense<0.000000e+00> : vector<128xf32>
    %93 = vector.multi_reduction <add>, %92, %cst_32 [0] : vector<16x128xf32> to vector<128xf32>
    %94 = vector.shape_cast %93 : vector<128xf32> to vector<1x128xf32>
    %cst_33 = arith.constant 1.250000e-01 : f32
    %95 = vector.broadcast %cst_33 : f32 to vector<1x128xf32>
    %96 = arith.mulf %94, %95 : vector<1x128xf32>
    %97 = tpu.concatenate %91, %96 in 1 : vector<1x128xf32>, vector<1x128xf32> -> vector<1x256xf32>
    %98 = tpu.concatenate %88, %97 in 0 : vector<1x256xf32>, vector<1x256xf32> -> vector<2x256xf32>
    %cst_34 = arith.constant dense<0.000000e+00> : vector<32xf32>
    %99 = vector.multi_reduction <add>, %75, %cst_34 [1] : vector<32x32xf32> to vector<32xf32>
    %100 = vector.shape_cast %99 : vector<32xf32> to vector<32x1xf32>
    %cst_35 = arith.constant 1.000000e+00 : f32
    %101 = vector.broadcast %cst_35 : f32 to vector<32x1xf32>
    %102 = arith.addf %100, %101 : vector<32x1xf32>
    %103 = math.rsqrt %102 : vector<32x1xf32>
    %104 = arith.truncf %67 : vector<32x128xf32> to vector<32x128xbf16>
    %c0_36 = arith.constant 0 : index
    %c0_37 = arith.constant 0 : index
    %105 = vector.load %arg7[%c0_36, %c0_37] : memref<128x128xf32, #tpu.memory_space<vmem>>, vector<128x128xf32>
    %106 = arith.truncf %105 : vector<128x128xf32> to vector<128x128xbf16>
    %cst_38 = arith.constant dense<0.000000e+00> : vector<32x128xf32>
    %107 = tpu.matmul %104, %106, %cst_38 {dimension_numbers = #tpu.dot_dimension_numbers<[1], [0], [0], [1], [0, 0, 1, 1], [], []>} : vector<32x128xbf16>, vector<128x128xbf16>, vector<32x128xf32> -> vector<32x128xf32>
    %108 = arith.truncf %75 : vector<32x32xf32> to vector<32x32xbf16>
    %109 = vector.broadcast %103 : vector<32x1xf32> to vector<32x128xf32>
    %110 = arith.mulf %109, %107 : vector<32x128xf32>
    %111 = arith.truncf %110 : vector<32x128xf32> to vector<32x128xbf16>
    %cst_39 = arith.constant dense<0.000000e+00> : vector<32x128xf32>
    %112 = tpu.matmul %108, %111, %cst_39 {dimension_numbers = #tpu.dot_dimension_numbers<[1], [0], [0], [1], [0, 0, 1, 1], [], []>} : vector<32x32xbf16>, vector<32x128xbf16>, vector<32x128xf32> -> vector<32x128xf32>
    %113 = vector.broadcast %103 : vector<32x1xf32> to vector<32x128xf32>
    %114 = arith.mulf %113, %112 : vector<32x128xf32>
    %115 = arith.mulf %103, %103 : vector<32x1xf32>
    %116 = vector.broadcast %115 : vector<32x1xf32> to vector<32x128xf32>
    %117 = arith.mulf %116, %107 : vector<32x128xf32>
    %118 = arith.addf %114, %117 : vector<32x128xf32>
    %c0_40 = arith.constant 0 : index
    %c0_41 = arith.constant 0 : index
    %119 = vector.load %arg8[%c0_40, %c0_41] : memref<1x128xf32, #tpu.memory_space<vmem>>, vector<1x128xf32>
    %120 = vector.broadcast %119 : vector<1x128xf32> to vector<32x128xf32>
    %121 = arith.addf %118, %120 : vector<32x128xf32>
    %cst_42 = arith.constant 0.000000e+00 : f32
    %122 = vector.broadcast %cst_42 : f32 to vector<32x128xf32>
    %123 = arith.maximumf %121, %122 : vector<32x128xf32>
    %c0_43 = arith.constant 0 : index
    %c0_44 = arith.constant 0 : index
    %124 = vector.load %arg12[%c0_43, %c0_44] : memref<128x1xf32, #tpu.memory_space<vmem>>, vector<128x1xf32>
    %cst_45 = arith.constant dense<0.000000e+00> : vector<32x1xf32>
    %125 = tpu.matmul %123, %124, %cst_45 {dimension_numbers = #tpu.dot_dimension_numbers<[1], [0], [0], [1], [0, 0, 1, 1], [], []>} : vector<32x128xf32>, vector<128x1xf32>, vector<32x1xf32> -> vector<32x1xf32>
    %126 = math.tanh %125 : vector<32x1xf32>
    %cst_46 = arith.constant -1.000000e+30 : f32
    %127 = vector.broadcast %cst_46 : f32 to vector<32x1xf32>
    %128 = arith.select %60, %126, %127 : vector<32x1xi1>, vector<32x1xf32>
    %129 = vector.broadcast %128 : vector<32x1xf32> to vector<32x32xf32>
    %130 = arith.mulf %4, %129 : vector<32x32xf32>
    %cst_47 = arith.constant dense<0.000000e+00> : vector<32xf32>
    %131 = vector.multi_reduction <add>, %130, %cst_47 [0] : vector<32x32xf32> to vector<32xf32>
    %132 = vector.shape_cast %131 : vector<32xf32> to vector<1x32xf32>
    %133 = vector.broadcast %132 : vector<1x32xf32> to vector<32x32xf32>
    %134 = vector.broadcast %128 : vector<32x1xf32> to vector<32x32xf32>
    %135 = arith.cmpf ogt, %133, %134 : vector<32x32xf32>
    %136 = vector.broadcast %132 : vector<1x32xf32> to vector<32x32xf32>
    %137 = vector.broadcast %128 : vector<32x1xf32> to vector<32x32xf32>
    %138 = arith.cmpf oeq, %136, %137 : vector<32x32xf32>
    %139 = arith.andi %138, %5 : vector<32x32xi1>
    %140 = arith.ori %135, %139 : vector<32x32xi1>
    %cst_48 = arith.constant 0.000000e+00 : f32
    %141 = vector.broadcast %cst_48 : f32 to vector<32x32xf32>
    %142 = arith.select %140, %6, %141 : vector<32x32xi1>, vector<32x32xf32>
    %cst_49 = arith.constant dense<0.000000e+00> : vector<32xf32>
    %143 = vector.multi_reduction <add>, %142, %cst_49 [1] : vector<32x32xf32> to vector<32xf32>
    %144 = vector.shape_cast %143 : vector<32xf32> to vector<32x1xf32>
    %cst_50 = arith.constant 7.000000e+00 : f32
    %145 = vector.broadcast %cst_50 : f32 to vector<32x1xf32>
    %146 = arith.cmpf olt, %144, %145 : vector<32x1xf32>
    %147 = arith.andi %146, %60 : vector<32x1xi1>
    %cst_51 = arith.constant 1.000000e+00 : f32
    %cst_52 = arith.constant 0.000000e+00 : f32
    %148 = vector.broadcast %cst_51 : f32 to vector<32x1xf32>
    %149 = vector.broadcast %cst_52 : f32 to vector<32x1xf32>
    %150 = arith.select %147, %148, %149 : vector<32x1xi1>, vector<32x1xf32>
    %151 = vector.broadcast %126 : vector<32x1xf32> to vector<32x128xf32>
    %152 = arith.mulf %123, %151 : vector<32x128xf32>
    %153 = vector.broadcast %150 : vector<32x1xf32> to vector<32x128xf32>
    %154 = arith.mulf %152, %153 : vector<32x128xf32>
    %155 = vector.broadcast %150 : vector<32x1xf32> to vector<32x32xf32>
    %156 = arith.mulf %75, %155 : vector<32x32xf32>
    %157 = vector.broadcast %150 : vector<32x1xf32> to vector<32x32xf32>
    %158 = arith.mulf %4, %157 : vector<32x32xf32>
    %cst_53 = arith.constant dense<0.000000e+00> : vector<32xf32>
    %159 = vector.multi_reduction <add>, %158, %cst_53 [0] : vector<32x32xf32> to vector<32xf32>
    %160 = vector.shape_cast %159 : vector<32xf32> to vector<1x32xf32>
    %161 = vector.broadcast %160 : vector<1x32xf32> to vector<32x32xf32>
    %162 = arith.mulf %156, %161 : vector<32x32xf32>
    %cst_54 = arith.constant -1.000000e+30 : f32
    %163 = vector.shape_cast %147 : vector<32x1xi1> to vector<32x1xi1>
    %164 = vector.broadcast %163 : vector<32x1xi1> to vector<32x128xi1>
    %165 = vector.broadcast %cst_54 : f32 to vector<32x128xf32>
    %166 = arith.select %164, %154, %165 : vector<32x128xi1>, vector<32x128xf32>
    %167 = vector.extract_strided_slice %166 {offsets = [0, 0], sizes = [16, 128], strides = [1, 1]} : vector<32x128xf32> to vector<16x128xf32>
    %cst_55 = arith.constant dense<0xFF800000> : vector<128xf32>
    %168 = vector.multi_reduction <maximumf>, %167, %cst_55 [0] : vector<16x128xf32> to vector<128xf32>
    %169 = vector.shape_cast %168 : vector<128xf32> to vector<1x128xf32>
    %170 = vector.extract_strided_slice %154 {offsets = [0, 0], sizes = [16, 128], strides = [1, 1]} : vector<32x128xf32> to vector<16x128xf32>
    %cst_56 = arith.constant dense<0.000000e+00> : vector<128xf32>
    %171 = vector.multi_reduction <add>, %170, %cst_56 [0] : vector<16x128xf32> to vector<128xf32>
    %172 = vector.shape_cast %171 : vector<128xf32> to vector<1x128xf32>
    %cst_57 = arith.constant 0.142857149 : f32
    %173 = vector.broadcast %cst_57 : f32 to vector<1x128xf32>
    %174 = arith.mulf %172, %173 : vector<1x128xf32>
    %175 = tpu.concatenate %169, %174 in 1 : vector<1x128xf32>, vector<1x128xf32> -> vector<1x256xf32>
    %176 = vector.extract_strided_slice %166 {offsets = [16, 0], sizes = [16, 128], strides = [1, 1]} : vector<32x128xf32> to vector<16x128xf32>
    %cst_58 = arith.constant dense<0xFF800000> : vector<128xf32>
    %177 = vector.multi_reduction <maximumf>, %176, %cst_58 [0] : vector<16x128xf32> to vector<128xf32>
    %178 = vector.shape_cast %177 : vector<128xf32> to vector<1x128xf32>
    %179 = vector.extract_strided_slice %154 {offsets = [16, 0], sizes = [16, 128], strides = [1, 1]} : vector<32x128xf32> to vector<16x128xf32>
    %cst_59 = arith.constant dense<0.000000e+00> : vector<128xf32>
    %180 = vector.multi_reduction <add>, %179, %cst_59 [0] : vector<16x128xf32> to vector<128xf32>
    %181 = vector.shape_cast %180 : vector<128xf32> to vector<1x128xf32>
    %cst_60 = arith.constant 0.142857149 : f32
    %182 = vector.broadcast %cst_60 : f32 to vector<1x128xf32>
    %183 = arith.mulf %181, %182 : vector<1x128xf32>
    %184 = tpu.concatenate %178, %183 in 1 : vector<1x128xf32>, vector<1x128xf32> -> vector<1x256xf32>
    %185 = tpu.concatenate %175, %184 in 0 : vector<1x256xf32>, vector<1x256xf32> -> vector<2x256xf32>
    %cst_61 = arith.constant dense<0.000000e+00> : vector<32xf32>
    %186 = vector.multi_reduction <add>, %162, %cst_61 [1] : vector<32x32xf32> to vector<32xf32>
    %187 = vector.shape_cast %186 : vector<32xf32> to vector<32x1xf32>
    %cst_62 = arith.constant 1.000000e+00 : f32
    %188 = vector.broadcast %cst_62 : f32 to vector<32x1xf32>
    %189 = arith.addf %187, %188 : vector<32x1xf32>
    %190 = math.rsqrt %189 : vector<32x1xf32>
    %191 = arith.truncf %154 : vector<32x128xf32> to vector<32x128xbf16>
    %c0_63 = arith.constant 0 : index
    %c0_64 = arith.constant 0 : index
    %192 = vector.load %arg9[%c0_63, %c0_64] : memref<128x128xf32, #tpu.memory_space<vmem>>, vector<128x128xf32>
    %193 = arith.truncf %192 : vector<128x128xf32> to vector<128x128xbf16>
    %cst_65 = arith.constant dense<0.000000e+00> : vector<32x128xf32>
    %194 = tpu.matmul %191, %193, %cst_65 {dimension_numbers = #tpu.dot_dimension_numbers<[1], [0], [0], [1], [0, 0, 1, 1], [], []>} : vector<32x128xbf16>, vector<128x128xbf16>, vector<32x128xf32> -> vector<32x128xf32>
    %195 = arith.truncf %162 : vector<32x32xf32> to vector<32x32xbf16>
    %196 = vector.broadcast %190 : vector<32x1xf32> to vector<32x128xf32>
    %197 = arith.mulf %196, %194 : vector<32x128xf32>
    %198 = arith.truncf %197 : vector<32x128xf32> to vector<32x128xbf16>
    %cst_66 = arith.constant dense<0.000000e+00> : vector<32x128xf32>
    %199 = tpu.matmul %195, %198, %cst_66 {dimension_numbers = #tpu.dot_dimension_numbers<[1], [0], [0], [1], [0, 0, 1, 1], [], []>} : vector<32x32xbf16>, vector<32x128xbf16>, vector<32x128xf32> -> vector<32x128xf32>
    %200 = vector.broadcast %190 : vector<32x1xf32> to vector<32x128xf32>
    %201 = arith.mulf %200, %199 : vector<32x128xf32>
    %202 = arith.mulf %190, %190 : vector<32x1xf32>
    %203 = vector.broadcast %202 : vector<32x1xf32> to vector<32x128xf32>
    %204 = arith.mulf %203, %194 : vector<32x128xf32>
    %205 = arith.addf %201, %204 : vector<32x128xf32>
    %c0_67 = arith.constant 0 : index
    %c0_68 = arith.constant 0 : index
    %206 = vector.load %arg10[%c0_67, %c0_68] : memref<1x128xf32, #tpu.memory_space<vmem>>, vector<1x128xf32>
    %207 = vector.broadcast %206 : vector<1x128xf32> to vector<32x128xf32>
    %208 = arith.addf %205, %207 : vector<32x128xf32>
    %cst_69 = arith.constant 0.000000e+00 : f32
    %209 = vector.broadcast %cst_69 : f32 to vector<32x128xf32>
    %210 = arith.maximumf %208, %209 : vector<32x128xf32>
    %c0_70 = arith.constant 0 : index
    %c0_71 = arith.constant 0 : index
    %211 = vector.load %arg13[%c0_70, %c0_71] : memref<128x1xf32, #tpu.memory_space<vmem>>, vector<128x1xf32>
    %cst_72 = arith.constant dense<0.000000e+00> : vector<32x1xf32>
    %212 = tpu.matmul %210, %211, %cst_72 {dimension_numbers = #tpu.dot_dimension_numbers<[1], [0], [0], [1], [0, 0, 1, 1], [], []>} : vector<32x128xf32>, vector<128x1xf32>, vector<32x1xf32> -> vector<32x1xf32>
    %213 = math.tanh %212 : vector<32x1xf32>
    %cst_73 = arith.constant -1.000000e+30 : f32
    %214 = vector.broadcast %cst_73 : f32 to vector<32x1xf32>
    %215 = arith.select %147, %213, %214 : vector<32x1xi1>, vector<32x1xf32>
    %216 = vector.broadcast %215 : vector<32x1xf32> to vector<32x32xf32>
    %217 = arith.mulf %4, %216 : vector<32x32xf32>
    %cst_74 = arith.constant dense<0.000000e+00> : vector<32xf32>
    %218 = vector.multi_reduction <add>, %217, %cst_74 [0] : vector<32x32xf32> to vector<32xf32>
    %219 = vector.shape_cast %218 : vector<32xf32> to vector<1x32xf32>
    %220 = vector.broadcast %219 : vector<1x32xf32> to vector<32x32xf32>
    %221 = vector.broadcast %215 : vector<32x1xf32> to vector<32x32xf32>
    %222 = arith.cmpf ogt, %220, %221 : vector<32x32xf32>
    %223 = vector.broadcast %219 : vector<1x32xf32> to vector<32x32xf32>
    %224 = vector.broadcast %215 : vector<32x1xf32> to vector<32x32xf32>
    %225 = arith.cmpf oeq, %223, %224 : vector<32x32xf32>
    %226 = arith.andi %225, %5 : vector<32x32xi1>
    %227 = arith.ori %222, %226 : vector<32x32xi1>
    %cst_75 = arith.constant 0.000000e+00 : f32
    %228 = vector.broadcast %cst_75 : f32 to vector<32x32xf32>
    %229 = arith.select %227, %6, %228 : vector<32x32xi1>, vector<32x32xf32>
    %cst_76 = arith.constant dense<0.000000e+00> : vector<32xf32>
    %230 = vector.multi_reduction <add>, %229, %cst_76 [1] : vector<32x32xf32> to vector<32xf32>
    %231 = vector.shape_cast %230 : vector<32xf32> to vector<32x1xf32>
    %cst_77 = arith.constant 6.000000e+00 : f32
    %232 = vector.broadcast %cst_77 : f32 to vector<32x1xf32>
    %233 = arith.cmpf olt, %231, %232 : vector<32x1xf32>
    %234 = arith.andi %233, %147 : vector<32x1xi1>
    %cst_78 = arith.constant 1.000000e+00 : f32
    %cst_79 = arith.constant 0.000000e+00 : f32
    %235 = vector.broadcast %cst_78 : f32 to vector<32x1xf32>
    %236 = vector.broadcast %cst_79 : f32 to vector<32x1xf32>
    %237 = arith.select %234, %235, %236 : vector<32x1xi1>, vector<32x1xf32>
    %238 = vector.broadcast %213 : vector<32x1xf32> to vector<32x128xf32>
    %239 = arith.mulf %210, %238 : vector<32x128xf32>
    %240 = vector.broadcast %237 : vector<32x1xf32> to vector<32x128xf32>
    %241 = arith.mulf %239, %240 : vector<32x128xf32>
    %cst_80 = arith.constant -1.000000e+30 : f32
    %242 = vector.shape_cast %234 : vector<32x1xi1> to vector<32x1xi1>
    %243 = vector.broadcast %242 : vector<32x1xi1> to vector<32x128xi1>
    %244 = vector.broadcast %cst_80 : f32 to vector<32x128xf32>
    %245 = arith.select %243, %241, %244 : vector<32x128xi1>, vector<32x128xf32>
    %246 = vector.extract_strided_slice %245 {offsets = [0, 0], sizes = [16, 128], strides = [1, 1]} : vector<32x128xf32> to vector<16x128xf32>
    %cst_81 = arith.constant dense<0xFF800000> : vector<128xf32>
    %247 = vector.multi_reduction <maximumf>, %246, %cst_81 [0] : vector<16x128xf32> to vector<128xf32>
    %248 = vector.shape_cast %247 : vector<128xf32> to vector<1x128xf32>
    %249 = vector.extract_strided_slice %241 {offsets = [0, 0], sizes = [16, 128], strides = [1, 1]} : vector<32x128xf32> to vector<16x128xf32>
    %cst_82 = arith.constant dense<0.000000e+00> : vector<128xf32>
    %250 = vector.multi_reduction <add>, %249, %cst_82 [0] : vector<16x128xf32> to vector<128xf32>
    %251 = vector.shape_cast %250 : vector<128xf32> to vector<1x128xf32>
    %cst_83 = arith.constant 0.166666672 : f32
    %252 = vector.broadcast %cst_83 : f32 to vector<1x128xf32>
    %253 = arith.mulf %251, %252 : vector<1x128xf32>
    %254 = tpu.concatenate %248, %253 in 1 : vector<1x128xf32>, vector<1x128xf32> -> vector<1x256xf32>
    %255 = vector.extract_strided_slice %245 {offsets = [16, 0], sizes = [16, 128], strides = [1, 1]} : vector<32x128xf32> to vector<16x128xf32>
    %cst_84 = arith.constant dense<0xFF800000> : vector<128xf32>
    %256 = vector.multi_reduction <maximumf>, %255, %cst_84 [0] : vector<16x128xf32> to vector<128xf32>
    %257 = vector.shape_cast %256 : vector<128xf32> to vector<1x128xf32>
    %258 = vector.extract_strided_slice %241 {offsets = [16, 0], sizes = [16, 128], strides = [1, 1]} : vector<32x128xf32> to vector<16x128xf32>
    %cst_85 = arith.constant dense<0.000000e+00> : vector<128xf32>
    %259 = vector.multi_reduction <add>, %258, %cst_85 [0] : vector<16x128xf32> to vector<128xf32>
    %260 = vector.shape_cast %259 : vector<128xf32> to vector<1x128xf32>
    %cst_86 = arith.constant 0.166666672 : f32
    %261 = vector.broadcast %cst_86 : f32 to vector<1x128xf32>
    %262 = arith.mulf %260, %261 : vector<1x128xf32>
    %263 = tpu.concatenate %257, %262 in 1 : vector<1x128xf32>, vector<1x128xf32> -> vector<1x256xf32>
    %264 = tpu.concatenate %254, %263 in 0 : vector<1x256xf32>, vector<1x256xf32> -> vector<2x256xf32>
    %265 = arith.addf %98, %185 : vector<2x256xf32>
    %266 = arith.addf %265, %264 : vector<2x256xf32>
    %267 = arith.truncf %266 : vector<2x256xf32> to vector<2x256xbf16>
    %c0_87 = arith.constant 0 : index
    %c0_88 = arith.constant 0 : index
    %268 = vector.load %arg14[%c0_87, %c0_88] : memref<256x128xf32, #tpu.memory_space<vmem>>, vector<256x128xf32>
    %269 = arith.truncf %268 : vector<256x128xf32> to vector<256x128xbf16>
    %cst_89 = arith.constant dense<0.000000e+00> : vector<2x128xf32>
    %270 = tpu.matmul %267, %269, %cst_89 {dimension_numbers = #tpu.dot_dimension_numbers<[1], [0], [0], [1], [0, 0, 1, 1], [], []>} : vector<2x256xbf16>, vector<256x128xbf16>, vector<2x128xf32> -> vector<2x128xf32>
    %c0_90 = arith.constant 0 : index
    %c0_91 = arith.constant 0 : index
    %271 = vector.load %arg15[%c0_90, %c0_91] : memref<1x128xf32, #tpu.memory_space<vmem>>, vector<1x128xf32>
    %272 = vector.broadcast %271 : vector<1x128xf32> to vector<2x128xf32>
    %273 = arith.addf %270, %272 : vector<2x128xf32>
    %cst_92 = arith.constant 0.000000e+00 : f32
    %274 = vector.broadcast %cst_92 : f32 to vector<2x128xf32>
    %275 = arith.maximumf %273, %274 : vector<2x128xf32>
    %276 = arith.truncf %275 : vector<2x128xf32> to vector<2x128xbf16>
    %c0_93 = arith.constant 0 : index
    %c0_94 = arith.constant 0 : index
    %277 = vector.load %arg16[%c0_93, %c0_94] : memref<128x64xf32, #tpu.memory_space<vmem>>, vector<128x64xf32>
    %278 = arith.truncf %277 : vector<128x64xf32> to vector<128x64xbf16>
    %cst_95 = arith.constant dense<0.000000e+00> : vector<2x64xf32>
    %279 = tpu.matmul %276, %278, %cst_95 {dimension_numbers = #tpu.dot_dimension_numbers<[1], [0], [0], [1], [0, 0, 1, 1], [], []>} : vector<2x128xbf16>, vector<128x64xbf16>, vector<2x64xf32> -> vector<2x64xf32>
    %c0_96 = arith.constant 0 : index
    %c0_97 = arith.constant 0 : index
    %280 = vector.load %arg17[%c0_96, %c0_97] : memref<1x64xf32, #tpu.memory_space<vmem>>, vector<1x64xf32>
    %281 = vector.broadcast %280 : vector<1x64xf32> to vector<2x64xf32>
    %282 = arith.addf %279, %281 : vector<2x64xf32>
    %cst_98 = arith.constant 0.000000e+00 : f32
    %283 = vector.broadcast %cst_98 : f32 to vector<2x64xf32>
    %284 = arith.maximumf %282, %283 : vector<2x64xf32>
    %285 = arith.truncf %284 : vector<2x64xf32> to vector<2x64xbf16>
    %c0_99 = arith.constant 0 : index
    %c0_100 = arith.constant 0 : index
    %286 = vector.load %arg18[%c0_99, %c0_100] : memref<64x128xf32, #tpu.memory_space<vmem>>, vector<64x128xf32>
    %287 = arith.truncf %286 : vector<64x128xf32> to vector<64x128xbf16>
    %cst_101 = arith.constant dense<0.000000e+00> : vector<2x128xf32>
    %288 = tpu.matmul %285, %287, %cst_101 {dimension_numbers = #tpu.dot_dimension_numbers<[1], [0], [0], [1], [0, 0, 1, 1], [], []>} : vector<2x64xbf16>, vector<64x128xbf16>, vector<2x128xf32> -> vector<2x128xf32>
    %c0_102 = arith.constant 0 : index
    %c0_103 = arith.constant 0 : index
    %289 = vector.load %arg19[%c0_102, %c0_103] : memref<1x128xf32, #tpu.memory_space<vmem>>, vector<1x128xf32>
    %290 = vector.broadcast %289 : vector<1x128xf32> to vector<2x128xf32>
    %291 = arith.addf %288, %290 : vector<2x128xf32>
    %cst_104 = arith.constant 0.000000e+00 : f32
    %292 = vector.broadcast %cst_104 : f32 to vector<2x128xf32>
    %293 = arith.subf %292, %291 : vector<2x128xf32>
    %294 = math.exp %293 : vector<2x128xf32>
    %cst_105 = arith.constant 1.000000e+00 : f32
    %295 = vector.broadcast %cst_105 : f32 to vector<2x128xf32>
    %296 = arith.addf %295, %294 : vector<2x128xf32>
    %cst_106 = arith.constant 1.000000e+00 : f32
    %297 = vector.broadcast %cst_106 : f32 to vector<2x128xf32>
    %298 = arith.divf %297, %296 : vector<2x128xf32>
    %c0_107 = arith.constant 0 : index
    %c0_108 = arith.constant 0 : index
    %299 = vector.load %arg20[%c0_107, %c0_108] : memref<2x128xf32, #tpu.memory_space<vmem>>, vector<2x128xf32>
    tpu.vector_store %arg20[%c0_107, %c0_108], %298 {strides = array<i32>} : memref<2x128xf32, #tpu.memory_space<vmem>>, vector<2x128xf32>,
    return
  }
  func.func @transform_0(%arg0: i32) -> (i32, i32) {
    %c0_i32 = arith.constant 0 : i32
    %c0_i32_0 = arith.constant 0 : i32
    %c0_i32_1 = arith.constant 0 : i32
    return %c0_i32, %c0_i32_0 : i32, i32
  }
  func.func @transform_1(%arg0: i32) -> (i32, i32) {
    %c0_i32 = arith.constant 0 : i32
    %c0_i32_0 = arith.constant 0 : i32
    %c0_i32_1 = arith.constant 0 : i32
    return %c0_i32, %c0_i32_0 : i32, i32
  }
  func.func @transform_2(%arg0: i32) -> (i32, i32) {
    %c0_i32 = arith.constant 0 : i32
    %c0_i32_0 = arith.constant 0 : i32
    %c0_i32_1 = arith.constant 0 : i32
    return %c0_i32, %c0_i32_0 : i32, i32
  }
  func.func @transform_3(%arg0: i32) -> (i32, i32) {
    %c0_i32 = arith.constant 0 : i32
    %c0_i32_0 = arith.constant 0 : i32
    %c0_i32_1 = arith.constant 0 : i32
    return %c0_i32, %c0_i32_0 : i32, i32
  }
  func.func @transform_4(%arg0: i32) -> (i32, i32) {
    %c0_i32 = arith.constant 0 : i32
    %c0_i32_0 = arith.constant 0 : i32
    %c0_i32_1 = arith.constant 0 : i32
    return %c0_i32, %c0_i32_0 : i32, i32
  }
  func.func @transform_5(%arg0: i32) -> (i32, i32) {
    %c0_i32 = arith.constant 0 : i32
    %c0_i32_0 = arith.constant 0 : i32
    %c0_i32_1 = arith.constant 0 : i32
    return %c0_i32, %c0_i32_0 : i32, i32
  }
  func.func @transform_6(%arg0: i32) -> (i32, i32) {
    %c0_i32 = arith.constant 0 : i32
    %c0_i32_0 = arith.constant 0 : i32
    %c0_i32_1 = arith.constant 0 : i32
    return %c0_i32, %c0_i32_0 : i32, i32
  }
  func.func @transform_7(%arg0: i32) -> (i32, i32) {
    %c0_i32 = arith.constant 0 : i32
    %c0_i32_0 = arith.constant 0 : i32
    %c0_i32_1 = arith.constant 0 : i32
    return %c0_i32, %c0_i32_0 : i32, i32
  }
  func.func @transform_8(%arg0: i32) -> (i32, i32) {
    %c0_i32 = arith.constant 0 : i32
    %c0_i32_0 = arith.constant 0 : i32
    %c0_i32_1 = arith.constant 0 : i32
    return %c0_i32, %c0_i32_0 : i32, i32
  }
  func.func @transform_9(%arg0: i32) -> (i32, i32) {
    %c0_i32 = arith.constant 0 : i32
    %c0_i32_0 = arith.constant 0 : i32
    %c0_i32_1 = arith.constant 0 : i32
    return %c0_i32, %c0_i32_0 : i32, i32
  }
  func.func @transform_10(%arg0: i32) -> (i32, i32) {
    %c0_i32 = arith.constant 0 : i32
    %c0_i32_0 = arith.constant 0 : i32
    %c0_i32_1 = arith.constant 0 : i32
    return %c0_i32, %c0_i32_0 : i32, i32
  }
  func.func @transform_11(%arg0: i32) -> (i32, i32) {
    %c0_i32 = arith.constant 0 : i32
    %c0_i32_0 = arith.constant 0 : i32
    %c0_i32_1 = arith.constant 0 : i32
    return %c0_i32, %c0_i32_0 : i32, i32
  }
  func.func @transform_12(%arg0: i32) -> (i32, i32) {
    %c0_i32 = arith.constant 0 : i32
    %c0_i32_0 = arith.constant 0 : i32
    %c0_i32_1 = arith.constant 0 : i32
    return %c0_i32, %c0_i32_0 : i32, i32
  }
  func.func @transform_13(%arg0: i32) -> (i32, i32) {
    %c0_i32 = arith.constant 0 : i32
    %c0_i32_0 = arith.constant 0 : i32
    %c0_i32_1 = arith.constant 0 : i32
    return %c0_i32, %c0_i32_0 : i32, i32
  }
  func.func @transform_14(%arg0: i32) -> (i32, i32) {
    %c0_i32 = arith.constant 0 : i32
    %c0_i32_0 = arith.constant 0 : i32
    %c0_i32_1 = arith.constant 0 : i32
    return %c0_i32, %c0_i32_0 : i32, i32
  }
  func.func @transform_15(%arg0: i32) -> (i32, i32) {
    %c0_i32 = arith.constant 0 : i32
    %c0_i32_0 = arith.constant 0 : i32
    %c0_i32_1 = arith.constant 0 : i32
    return %c0_i32, %c0_i32_0 : i32, i32
  }
  func.func @transform_16(%arg0: i32) -> (i32, i32) {
    %c0_i32 = arith.constant 0 : i32
    %c0_i32_0 = arith.constant 0 : i32
    %c0_i32_1 = arith.constant 0 : i32
    return %c0_i32, %c0_i32_0 : i32, i32
  }
  func.func @transform_17(%arg0: i32) -> (i32, i32) {
    %c0_i32 = arith.constant 0 : i32
    %c0_i32_0 = arith.constant 0 : i32
    %c0_i32_1 = arith.constant 0 : i32
    return %c0_i32, %c0_i32_0 : i32, i32
  }
  func.func @transform_18(%arg0: i32) -> (i32, i32) {
    %c0_i32 = arith.constant 0 : i32
    %c0_i32_0 = arith.constant 0 : i32
    %c0_i32_1 = arith.constant 0 : i32
    return %c0_i32, %c0_i32_0 : i32, i32
  }
  func.func @transform_19(%arg0: i32) -> (i32, i32) {
    %c0_i32 = arith.constant 0 : i32
    %c0_i32_0 = arith.constant 0 : i32
    %c0_i32_1 = arith.constant 0 : i32
    return %c0_i32, %c0_i32_0 : i32, i32
  }
}

</mosaic_0001>

<llo_original>
// kernel: fwd.1
$region0: #{fwd.1}
  #allocation0 [shape = 'u32[]', space=smem, size = 0x4, offset = 0x4, fixed_abs, tag = 'smem constant byte address 0x4 - core index']
  #allocation1 [shape = 'u32[144,128]{1,0:T(1,128)}', space=vmem, size = 0x12000, scoped, tag = 'internal scratch']
  %s0 = inlined_call_operand.hbm [shape: f32[32,32], index: 0, kind: input, shape index: {}]
  %s1 = inlined_call_operand.vmem [shape: f32[32,8], index: 1, kind: input, shape index: {}]
  %s2 = inlined_call_operand.vmem [shape: f32[32,1], index: 2, kind: input, shape index: {}]
  %s3 = inlined_call_operand.hbm [shape: f32[32,32], index: 3, kind: input, shape index: {}]
  %s4 = inlined_call_operand.vmem [shape: f32[8,128], index: 4, kind: input, shape index: {}]
  %s5 = inlined_call_operand.vmem [shape: f32[1,128], index: 5, kind: input, shape index: {}]
  %s6 = inlined_call_operand.vmem [shape: f32[128,128], index: 6, kind: input, shape index: {}]
  %s7 = inlined_call_operand.vmem [shape: f32[1,128], index: 7, kind: input, shape index: {}]
  %s8 = inlined_call_operand.vmem [shape: f32[128,128], index: 8, kind: input, shape index: {}]
  %s9 = inlined_call_operand.vmem [shape: f32[1,128], index: 9, kind: input, shape index: {}]
  %s10 = inlined_call_operand.vmem [shape: f32[128,1], index: 10, kind: input, shape index: {}]
  %s11 = inlined_call_operand.vmem [shape: f32[128,1], index: 11, kind: input, shape index: {}]
  %s12 = inlined_call_operand.vmem [shape: f32[128,1], index: 12, kind: input, shape index: {}]
  %s13 = inlined_call_operand.vmem [shape: f32[256,128], index: 13, kind: input, shape index: {}]
  %s14 = inlined_call_operand.vmem [shape: f32[1,128], index: 14, kind: input, shape index: {}]
  %s15 = inlined_call_operand.vmem [shape: f32[128,64], index: 15, kind: input, shape index: {}]
  %s16 = inlined_call_operand.vmem [shape: f32[1,64], index: 16, kind: input, shape index: {}]
  %s17 = inlined_call_operand.vmem [shape: f32[64,128], index: 17, kind: input, shape index: {}]
  %s18 = inlined_call_operand.vmem [shape: f32[1,128], index: 18, kind: input, shape index: {}]
  %s19 = inlined_call_operand.hbm [shape: f32[2,128], index: 19, kind: output, shape index: {}]
  %s20 = sld [smem:[#allocation0]]
  $region94: #{fwd.1} parent=0
    _
  %s22 = ssub.s32 1, %s20
  %s23 = scalar_select 0, %s22, %s20
  $region1: #{fwd.1} parent=0
    #allocation2 [shape = 'u8[16384]{0}', space=vmem, size = 0x4000, scoped, tag = 'input window, operand 0, single buffered']
    #allocation3 [shape = 's32[1]{0}', space=sflag, size = 0x4, scoped, tag = 'scoped memory for fwd.1']
    #allocation4 [shape = 's32[1]{0}', space=sflag, size = 0x4, scoped, tag = 'scoped memory for fwd.1']
    #allocation5 [shape = 'u8[16384]{0}', space=vmem, size = 0x4000, scoped, tag = 'input window, operand 3, single buffered']
    #allocation6 [shape = 's32[1]{0}', space=sflag, size = 0x4, scoped, tag = 'scoped memory for fwd.1']
    #allocation7 [shape = 'u8[1024]{0}', space=vmem, size = 0x400, scoped, tag = 'output window, operand 0, single buffered']
    %24 = vsyncpa [#allocation3], 0
    %25 = vsyncpa [#allocation6], 0
    %26 = vsyncpa [#allocation4], 0
    // Predicated region
    $region2: #{fwd.1} parent=1 // pred_check
      _
    $region3: #{fwd.1} parent=1 // pred_check_branch
      %28 = sbr.rel (0) target = $region5
    $region4: #{fwd.1} parent=1 // pred_region
      %s30 = ssub.s32 512, 512
      %31 = vsyncadd [#allocation3], %s30
      %s32 = sshll.u32 [#allocation2], 4
      %s33 = int_to_ptr.vmem [resolvable:$true] %s32
      %38 = dma.hbm_to_vmem [thread:$0]  %s0, 512, %s33, [#allocation3], 128, 128, 8
    $region5: #{fwd.1} parent=1 // pred_fallthru
      _
    // Predicated region
    $region6: #{fwd.1} parent=1 // pred_check
      _
    $region7: #{fwd.1} parent=1 // pred_check_branch
      %40 = sbr.rel (0) target = $region9
    $region8: #{fwd.1} parent=1 // pred_region
      _
    $region9: #{fwd.1} parent=1 // pred_fallthru
      _
    // Predicated region
    $region10: #{fwd.1} parent=1 // pred_check
      _
    $region11: #{fwd.1} parent=1 // pred_check_branch
      %42 = sbr.rel (0) target = $region13
    $region12: #{fwd.1} parent=1 // pred_region
      _
    $region13: #{fwd.1} parent=1 // pred_fallthru
      _
    // Predicated region
    $region14: #{fwd.1} parent=1 // pred_check
      _
    $region15: #{fwd.1} parent=1 // pred_check_branch
      %44 = sbr.rel (0) target = $region17
    $region16: #{fwd.1} parent=1 // pred_region
      %s46 = ssub.s32 512, 512
      %47 = vsyncadd [#allocation6], %s46
      %s48 = sshll.u32 [#allocation5], 4
      %s49 = int_to_ptr.vmem [resolvable:$true] %s48
      %54 = dma.hbm_to_vmem [thread:$0]  %s3, 512, %s49, [#allocation6], 128, 128, 8
    $region17: #{fwd.1} parent=1 // pred_fallthru
      _
    // Predicated region
    $region18: #{fwd.1} parent=1 // pred_check
      _
    $region19: #{fwd.1} parent=1 // pred_check_branch
      %56 = sbr.rel (0) target = $region21
    $region20: #{fwd.1} parent=1 // pred_region
      _
    $region21: #{fwd.1} parent=1 // pred_fallthru
      _
    // Predicated region
    $region22: #{fwd.1} parent=1 // pred_check
      _
    $region23: #{fwd.1} parent=1 // pred_check_branch
      %58 = sbr.rel (0) target = $region25
    $region24: #{fwd.1} parent=1 // pred_region
      _
    $region25: #{fwd.1} parent=1 // pred_fallthru
      _
    // Predicated region
    $region26: #{fwd.1} parent=1 // pred_check
      _
    $region27: #{fwd.1} parent=1 // pred_check_branch
      %60 = sbr.rel (0) target = $region29
    $region28: #{fwd.1} parent=1 // pred_region
      _
    $region29: #{fwd.1} parent=1 // pred_fallthru
      _
    // Predicated region
    $region30: #{fwd.1} parent=1 // pred_check
      _
    $region31: #{fwd.1} parent=1 // pred_check_branch
      %62 = sbr.rel (0) target = $region33
    $region32: #{fwd.1} parent=1 // pred_region
      _
    $region33: #{fwd.1} parent=1 // pred_fallthru
      _
    // Predicated region
    $region34: #{fwd.1} parent=1 // pred_check
      _
    $region35: #{fwd.1} parent=1 // pred_check_branch
      %64 = sbr.rel (0) target = $region37
    $region36: #{fwd.1} parent=1 // pred_region
      _
    $region37: #{fwd.1} parent=1 // pred_fallthru
      _
    // Predicated region
    $region38: #{fwd.1} parent=1 // pred_check
      _
    $region39: #{fwd.1} parent=1 // pred_check_branch
      %66 = sbr.rel (0) target = $region41
    $region40: #{fwd.1} parent=1 // pred_region
      _
    $region41: #{fwd.1} parent=1 // pred_fallthru
      _
    // Predicated region
    $region42: #{fwd.1} parent=1 // pred_check
      _
    $region43: #{fwd.1} parent=1 // pred_check_branch
      %68 = sbr.rel (0) target = $region45
    $region44: #{fwd.1} parent=1 // pred_region
      _
    $region45: #{fwd.1} parent=1 // pred_fallthru
      _
    // Predicated region
    $region46: #{fwd.1} parent=1 // pred_check
      _
    $region47: #{fwd.1} parent=1 // pred_check_branch
      %70 = sbr.rel (0) target = $region49
    $region48: #{fwd.1} parent=1 // pred_region
      _
    $region49: #{fwd.1} parent=1 // pred_fallthru
      _
    // Predicated region
    $region50: #{fwd.1} parent=1 // pred_check
      _
    $region51: #{fwd.1} parent=1 // pred_check_branch
      %72 = sbr.rel (0) target = $region53
    $region52: #{fwd.1} parent=1 // pred_region
      _
    $region53: #{fwd.1} parent=1 // pred_fallthru
      _
    // Predicated region
    $region54: #{fwd.1} parent=1 // pred_check
      _
    $region55: #{fwd.1} parent=1 // pred_check_branch
      %74 = sbr.rel (0) target = $region57
    $region56: #{fwd.1} parent=1 // pred_region
      _
    $region57: #{fwd.1} parent=1 // pred_fallthru
      _
    // Predicated region
    $region58: #{fwd.1} parent=1 // pred_check
      _
    $region59: #{fwd.1} parent=1 // pred_check_branch
      %76 = sbr.rel (0) target = $region61
    $region60: #{fwd.1} parent=1 // pred_region
      _
    $region61: #{fwd.1} parent=1 // pred_fallthru
      _
    // Predicated region
    $region62: #{fwd.1} parent=1 // pred_check
      _
    $region63: #{fwd.1} parent=1 // pred_check_branch
      %78 = sbr.rel (0) target = $region65
    $region64: #{fwd.1} parent=1 // pred_region
      _
    $region65: #{fwd.1} parent=1 // pred_fallthru
      _
    // Predicated region
    $region66: #{fwd.1} parent=1 // pred_check
      _
    $region67: #{fwd.1} parent=1 // pred_check_branch
      %80 = sbr.rel (0) target = $region69
    $region68: #{fwd.1} parent=1 // pred_region
      _
    $region69: #{fwd.1} parent=1 // pred_fallthru
      _
    // Predicated region
    $region70: #{fwd.1} parent=1 // pred_check
      _
    $region71: #{fwd.1} parent=1 // pred_check_branch
      %82 = sbr.rel (0) target = $region73
    $region72: #{fwd.1} parent=1 // pred_region
      _
    $region73: #{fwd.1} parent=1 // pred_fallthru
      _
    // Predicated region
    $region74: #{fwd.1} parent=1 // pred_check
      _
    $region75: #{fwd.1} parent=1 // pred_check_branch
      %84 = sbr.rel (0) target = $region77
    $region76: #{fwd.1} parent=1 // pred_region
      _
    $region77: #{fwd.1} parent=1 // pred_fallthru
      _
    // Predicated region
    $region78: #{fwd.1} parent=1 // pred_check
      _
    $region79: #{fwd.1} parent=1 // pred_check_branch
      %86 = sbr.rel (0) target = $region81
    $region80: #{fwd.1} parent=1 // pred_region
      %87 = dma.done [#allocation3], 512
    $region81: #{fwd.1} parent=1 // pred_fallthru
      _
    // Predicated region
    $region82: #{fwd.1} parent=1 // pred_check
      _
    $region83: #{fwd.1} parent=1 // pred_check_branch
      %89 = sbr.rel (0) target = $region85
    $region84: #{fwd.1} parent=1 // pred_region
      %90 = dma.done [#allocation6], 512
    $region85: #{fwd.1} parent=1 // pred_fallthru
      _
    %v92 = vlaneseq
    %v93 = vshrl.u32 %v92, 7
    %v94 = vadd.s32 %v93, 8
    %v95 = vadd.s32 %v93, 16
    %v96 = vadd.s32 %v93, 24
    %v97 = vlaneseq
    %v98 = vand.u32 %v97, 127
    %vm99 = vcmp.eq.s32.totalorder %v93, %v98
    %vm100 = vcmp.eq.s32.totalorder %v94, %v98
    %vm101 = vcmp.eq.s32.totalorder %v95, %v98
    %vm102 = vcmp.eq.s32.totalorder %v96, %v98
    %v103 = vsel %vm99, 1, 0
    %v104 = vsel %vm100, 1, 0
    %v105 = vsel %vm101, 1, 0
    %v106 = vsel %vm102, 1, 0
    %v107 = vcvt.s32.f32 %v103
    %v108 = vcvt.s32.f32 %v104
    %v109 = vcvt.s32.f32 %v105
    %v110 = vcvt.s32.f32 %v106
    %vm111 = vcmp.lt.s32.totalorder %v98, %v93
    %vm112 = vcmp.lt.s32.totalorder %v98, %v94
    %vm113 = vcmp.lt.s32.totalorder %v98, %v95
    %vm114 = vcmp.lt.s32.totalorder %v98, %v96
    %v115 = vld [vmem:[#allocation5] sm:$0xff]
    %v116 = vld [vmem:[#allocation5 + $0x8] sm:$0xff]
    %v117 = vld [vmem:[#allocation5 + $0x10] sm:$0xff]
    %v118 = vld [vmem:[#allocation5 + $0x18] sm:$0xff]
    %v119 = vld [vmem:[#allocation2] sm:$0xff]
    %v120 = vld [vmem:[#allocation2 + $0x8] sm:$0xff]
    %v121 = vld [vmem:[#allocation2 + $0x10] sm:$0xff]
    %v122 = vld [vmem:[#allocation2 + $0x18] sm:$0xff]
    %v123 = vld [vmem:[%s2] sm:$0xff]
    %v124 = vld [vmem:[%s2 + $0x8] sm:$0xff]
    %v125 = vld [vmem:[%s2 + $0x10] sm:$0xff]
    %v126 = vld [vmem:[%s2 + $0x18] sm:$0xff]
    %vm127 = vcmp.gt.f32.partialorder %v123, 0.5
    %vm128 = vcmp.gt.f32.partialorder %v124, 0.5
    %vm129 = vcmp.gt.f32.partialorder %v125, 0.5
    %vm130 = vcmp.gt.f32.partialorder %v126, 0.5
    %v131 = vld [vmem:[%s1] sm:$0xff]
    %v132 = vld [vmem:[%s1 + $0x8] sm:$0xff]
    %v133 = vld [vmem:[%s1 + $0x10] sm:$0xff]
    %v134 = vld [vmem:[%s1 + $0x18] sm:$0xff]
    %vm135 = vcmask 261120
    %v136 = vsel %vm135, %v119, 0.0
    %137 = vadd.xlane.f32.xlu0 %v136
    %v138 = vpop.xlane.xlu0 %137
    %v139 = vsel %vm135, %v120, 0.0
    %140 = vadd.xlane.f32.xlu0 %v139
    %v141 = vpop.xlane.xlu0 %140
    %v142 = vsel %vm135, %v121, 0.0
    %143 = vadd.xlane.f32.xlu0 %v142
    %v144 = vpop.xlane.xlu0 %143
    %v145 = vsel %vm135, %v122, 0.0
    %146 = vadd.xlane.f32.xlu0 %v145
    %v147 = vpop.xlane.xlu0 %146
    %v148 = vadd.f32 %v138, 1.0
    %v149 = vadd.f32 %v141, 1.0
    %v150 = vadd.f32 %v144, 1.0
    %v151 = vadd.f32 %v147, 1.0
    %v152 = vrsqrt.pop %v148
    %v153 = vrsqrt.pop %v149
    %v154 = vrsqrt.pop %v150
    %v155 = vrsqrt.pop %v151
    %v156 = vpack.c.bf16 %v132, %v131
    %v157 = vpack.c.bf16 %v134, %v133
    %v158 = vld [vmem:[%s4] sm:$0xff]
    %v159 = vpack.c.bf16 %v158, %v158
    %vm160 = vcmask 64512
    %v162 = vsel %vm160, %v156, 0
    %v165 = vsel %vm160, %v157, 0
    %vm167 = vcmask 1043456
    %v169 = vsel %vm167, %v159, 0
    %171 = vmatprep.subr.bf16.mxu0 0
    %172 = vmatpush1.bf16.msra.mxu0 0
    %173 = vmatprep.subr.bf16.mxu0 0
    %174 = vmatpush1.bf16.msra.mxu0 0
    %175 = vmatprep.subr.bf16.mxu0 0
    %176 = vmatpush1.bf16.msra.mxu0 0
    %177 = vmatprep.subr.bf16.mxu0 0
    %178 = vmatpush1.bf16.msra.mxu0 0
    %179 = vmatprep.subr.bf16.mxu0 0
    %180 = vmatpush1.bf16.msra.mxu0 0
    %181 = vmatprep.subr.bf16.mxu0 0
    %182 = vmatpush1.bf16.msra.mxu0 0
    %183 = vmatprep.subr.bf16.mxu0 0
    %184 = vmatpush1.bf16.msra.mxu0 0
    %185 = vmatprep.subr.bf16.mxu0 0
    %186 = vmatpush1.bf16.msra.mxu0 %v169
    %187 = vmatprep.subr.bf16.mxu0 0
    %188 = vmatpush2.bf16.msra.mxu0 0
    %189 = vmatprep.subr.bf16.mxu0 0
    %190 = vmatpush2.bf16.msra.mxu0 0
    %191 = vmatprep.subr.bf16.mxu0 0
    %192 = vmatpush2.bf16.msra.mxu0 0
    %193 = vmatprep.subr.bf16.mxu0 0
    %194 = vmatpush2.bf16.msra.mxu0 0
    %195 = vmatprep.subr.bf16.mxu0 0
    %196 = vmatpush2.bf16.msra.mxu0 0
    %197 = vmatprep.subr.bf16.mxu0 0
    %198 = vmatpush2.bf16.msra.mxu0 0
    %199 = vmatprep.subr.bf16.mxu0 0
    %200 = vmatpush2.bf16.msra.mxu0 0
    %201 = vmatprep.subr.bf16.mxu0 0
    %202 = vmatpush2.bf16.msra.mxu0 0
    %203 = vmatprep.mubr.bf16.mxu0 0
    %204 = vmatmul.mubr.bf16.gmra.mxu0 %v162
    %v205 = vpop.f32.mrf.mxu0
    %v206 = vadd.f32 0.0, %v205
    %v207 = vpop.f32.mrf.mxu0
    %v208 = vpop.f32.mrf.mxu0
    %v209 = vadd.f32 0.0, %v208
    %v210 = vpop.f32.mrf.mxu0
    %211 = vmatprep.mubr.bf16.mxu0 0
    %212 = vmatmul.mubr.bf16.gmra.mxu0 %v165
    %v213 = vpop.f32.mrf.mxu0
    %v214 = vadd.f32 0.0, %v213
    %v215 = vpop.f32.mrf.mxu0
    %v216 = vpop.f32.mrf.mxu0
    %v217 = vadd.f32 0.0, %v216
    %v218 = vpop.f32.mrf.mxu0
    %219 = vdwg.mxu0
    %v220 = vpack.c.bf16 %v120, %v119
    %v221 = vpack.c.bf16 %v122, %v121
    %v222 = vmul.f32 %v152, %v206
    %v223 = vmul.f32 %v153, %v209
    %v224 = vmul.f32 %v154, %v214
    %v225 = vmul.f32 %v155, %v217
    %v226 = vpack.c.bf16 %v223, %v222
    %v227 = vpack.c.bf16 %v225, %v224
    %v229 = vsel %vm135, %v220, 0
    %v232 = vsel %vm135, %v221, 0
    %234 = vmatprep.subr.bf16.mxu0 0
    %235 = vmatpush1.bf16.msra.mxu0 0
    %236 = vmatprep.subr.bf16.mxu0 0
    %237 = vmatpush1.bf16.msra.mxu0 0
    %238 = vmatprep.subr.bf16.mxu0 0
    %239 = vmatpush1.bf16.msra.mxu0 0
    %240 = vmatprep.subr.bf16.mxu0 0
    %241 = vmatpush1.bf16.msra.mxu0 0
    %242 = vmatprep.subr.bf16.mxu0 0
    %243 = vmatpush1.bf16.msra.mxu0 0
    %244 = vmatprep.subr.bf16.mxu0 0
    %245 = vmatpush1.bf16.msra.mxu0 0
    %246 = vmatprep.subr.bf16.mxu0 0
    %247 = vmatpush1.bf16.msra.mxu0 %v227
    %248 = vmatprep.subr.bf16.mxu0 0
    %249 = vmatpush1.bf16.msra.mxu0 %v226
    %250 = vmatprep.subr.bf16.mxu0 0
    %251 = vmatpush2.bf16.msra.mxu0 0
    %252 = vmatprep.subr.bf16.mxu0 0
    %253 = vmatpush2.bf16.msra.mxu0 0
    %254 = vmatprep.subr.bf16.mxu0 0
    %255 = vmatpush2.bf16.msra.mxu0 0
    %256 = vmatprep.subr.bf16.mxu0 0
    %257 = vmatpush2.bf16.msra.mxu0 0
    %258 = vmatprep.subr.bf16.mxu0 0
    %259 = vmatpush2.bf16.msra.mxu0 0
    %260 = vmatprep.subr.bf16.mxu0 0
    %261 = vmatpush2.bf16.msra.mxu0 0
    %262 = vmatprep.subr.bf16.mxu0 0
    %263 = vmatpush2.bf16.msra.mxu0 0
    %264 = vmatprep.subr.bf16.mxu0 0
    %265 = vmatpush2.bf16.msra.mxu0 0
    %266 = vmatprep.mubr.bf16.mxu0 0
    %267 = vmatmul.mubr.bf16.gmra.mxu0 %v229
    %v268 = vpop.f32.mrf.mxu0
    %v269 = vadd.f32 0.0, %v268
    %v270 = vpop.f32.mrf.mxu0
    %v271 = vpop.f32.mrf.mxu0
    %v272 = vadd.f32 0.0, %v271
    %v273 = vpop.f32.mrf.mxu0
    %274 = vmatprep.mubr.bf16.mxu0 0
    %275 = vmatmul.mubr.bf16.gmra.mxu0 %v232
    %v276 = vpop.f32.mrf.mxu0
    %v277 = vadd.f32 0.0, %v276
    %v278 = vpop.f32.mrf.mxu0
    %v279 = vpop.f32.mrf.mxu0
    %v280 = vadd.f32 0.0, %v279
    %v281 = vpop.f32.mrf.mxu0
    %282 = vdwg.mxu0
    %v283 = vmul.f32 %v152, %v269
    %v284 = vmul.f32 %v153, %v272
    %v285 = vmul.f32 %v154, %v277
    %v286 = vmul.f32 %v155, %v280
    %v287 = vmul.f32 %v152, %v152
    %v288 = vmul.f32 %v153, %v153
    %v289 = vmul.f32 %v154, %v154
    %v290 = vmul.f32 %v155, %v155
    %v291 = vmul.f32 %v287, %v206
    %v292 = vmul.f32 %v288, %v209
    %v293 = vmul.f32 %v289, %v214
    %v294 = vmul.f32 %v290, %v217
    %v295 = vadd.f32 %v283, %v291
    %v296 = vadd.f32 %v284, %v292
    %v297 = vadd.f32 %v285, %v293
    %v298 = vadd.f32 %v286, %v294
    %v299 = vld [vmem:[%s5] sm:$0x1]
    %v301 = vlaneseq
    %v302 = vshrl.u32 %v301, 7
    %v303 = vsub.s32 0, %v302
    %v304 = vrot.slane %v299, %v303
    %v306 = vadd.f32 %v295, %v304
    %v307 = vadd.f32 %v296, %v304
    %v308 = vadd.f32 %v297, %v304
    %v309 = vadd.f32 %v298, %v304
    %v310 = vmax.f32 %v306, 0.0
    %v311 = vmax.f32 %v307, 0.0
    %v312 = vmax.f32 %v308, 0.0
    %v313 = vmax.f32 %v309, 0.0
    %v314 = vld [vmem:[%s10] sm:$0xff]
    %v315 = vld [vmem:[%s10 + $0x8] sm:$0xff]
    %v316 = vld [vmem:[%s10 + $0x10] sm:$0xff]
    %v317 = vld [vmem:[%s10 + $0x18] sm:$0xff]
    %v318 = vld [vmem:[%s10 + $0x20] sm:$0xff]
    %v319 = vld [vmem:[%s10 + $0x28] sm:$0xff]
    %v320 = vld [vmem:[%s10 + $0x30] sm:$0xff]
    %v321 = vld [vmem:[%s10 + $0x38] sm:$0xff]
    %v322 = vld [vmem:[%s10 + $0x40] sm:$0xff]
    %v323 = vld [vmem:[%s10 + $0x48] sm:$0xff]
    %v324 = vld [vmem:[%s10 + $0x50] sm:$0xff]
    %v325 = vld [vmem:[%s10 + $0x58] sm:$0xff]
    %v326 = vld [vmem:[%s10 + $0x60] sm:$0xff]
    %v327 = vld [vmem:[%s10 + $0x68] sm:$0xff]
    %v328 = vld [vmem:[%s10 + $0x70] sm:$0xff]
    %v329 = vld [vmem:[%s10 + $0x78] sm:$0xff]
    %330 = vmatprep.subr.mxu0 0.0
    %331 = vmatpush1.msra.mxu0 %v329
    %332 = vmatprep.subr.mxu0 0.0
    %333 = vmatpush1.msra.mxu0 %v328
    %334 = vmatprep.subr.mxu0 0.0
    %335 = vmatpush1.msra.mxu0 %v327
    %336 = vmatprep.subr.mxu0 0.0
    %337 = vmatpush1.msra.mxu0 %v326
    %338 = vmatprep.subr.mxu0 0.0
    %339 = vmatpush1.msra.mxu0 %v325
    %340 = vmatprep.subr.mxu0 0.0
    %341 = vmatpush1.msra.mxu0 %v324
    %342 = vmatprep.subr.mxu0 0.0
    %343 = vmatpush1.msra.mxu0 %v323
    %344 = vmatprep.subr.mxu0 0.0
    %345 = vmatpush1.msra.mxu0 %v322
    %346 = vmatprep.subr.mxu0 0.0
    %347 = vmatpush1.msra.mxu0 %v321
    %348 = vmatprep.subr.mxu0 0.0
    %349 = vmatpush1.msra.mxu0 %v320
    %350 = vmatprep.subr.mxu0 0.0
    %351 = vmatpush1.msra.mxu0 %v319
    %352 = vmatprep.subr.mxu0 0.0
    %353 = vmatpush1.msra.mxu0 %v318
    %354 = vmatprep.subr.mxu0 0.0
    %355 = vmatpush1.msra.mxu0 %v317
    %356 = vmatprep.subr.mxu0 0.0
    %357 = vmatpush1.msra.mxu0 %v316
    %358 = vmatprep.subr.mxu0 0.0
    %359 = vmatpush1.msra.mxu0 %v315
    %360 = vmatprep.subr.mxu0 0.0
    %361 = vmatpush1.msra.mxu0 %v314
    %362 = vmatprep.subr.mxu0 0.0
    %363 = vmatpush2.msra.mxu0 0.0
    %364 = vmatprep.subr.mxu0 0.0
    %365 = vmatpush2.msra.mxu0 0.0
    %366 = vmatprep.subr.mxu0 0.0
    %367 = vmatpush2.msra.mxu0 0.0
    %368 = vmatprep.subr.mxu0 0.0
    %369 = vmatpush2.msra.mxu0 0.0
    %370 = vmatprep.subr.mxu0 0.0
    %371 = vmatpush2.msra.mxu0 0.0
    %372 = vmatprep.subr.mxu0 0.0
    %373 = vmatpush2.msra.mxu0 0.0
    %374 = vmatprep.subr.mxu0 0.0
    %375 = vmatpush2.msra.mxu0 0.0
    %376 = vmatprep.subr.mxu0 0.0
    %377 = vmatpush2.msra.mxu0 0.0
    %378 = vmatprep.subr.mxu0 0.0
    %379 = vmatpush2.msra.mxu0 0.0
    %380 = vmatprep.subr.mxu0 0.0
    %381 = vmatpush2.msra.mxu0 0.0
    %382 = vmatprep.subr.mxu0 0.0
    %383 = vmatpush2.msra.mxu0 0.0
    %384 = vmatprep.subr.mxu0 0.0
    %385 = vmatpush2.msra.mxu0 0.0
    %386 = vmatprep.subr.mxu0 0.0
    %387 = vmatpush2.msra.mxu0 0.0
    %388 = vmatprep.subr.mxu0 0.0
    %389 = vmatpush2.msra.mxu0 0.0
    %390 = vmatprep.subr.mxu0 0.0
    %391 = vmatpush2.msra.mxu0 0.0
    %392 = vmatprep.subr.mxu0 0.0
    %393 = vmatpush2.msra.mxu0 0.0
    %394 = vmatprep.mubr.f32.mxu0 0.0
    %395 = vmatmul.mubr.f32.gmra.mxu0 %v310
    %v396 = vpop.f32.mrf.mxu0
    %v397 = vadd.f32 0.0, %v396
    %v398 = vpop.f32.mrf.mxu0
    %399 = vmatprep.mubr.f32.mxu0 0.0
    %400 = vmatmul.mubr.f32.gmra.mxu0 %v311
    %v401 = vpop.f32.mrf.mxu0
    %v402 = vadd.f32 0.0, %v401
    %v403 = vpop.f32.mrf.mxu0
    %404 = vmatprep.mubr.f32.mxu0 0.0
    %405 = vmatmul.mubr.f32.gmra.mxu0 %v312
    %v406 = vpop.f32.mrf.mxu0
    %v407 = vadd.f32 0.0, %v406
    %v408 = vpop.f32.mrf.mxu0
    %409 = vmatprep.mubr.f32.mxu0 0.0
    %410 = vmatmul.mubr.f32.gmra.mxu0 %v313
    %v411 = vpop.f32.mrf.mxu0
    %v412 = vadd.f32 0.0, %v411
    %v413 = vpop.f32.mrf.mxu0
    %414 = vdwg.mxu0
    %v415 = vtanh.pop %v397
    %v416 = vtanh.pop %v402
    %v417 = vtanh.pop %v407
    %v418 = vtanh.pop %v412
    %v419 = vsel %vm127, %v415, -1e+30
    %v420 = vsel %vm128, %v416, -1e+30
    %v421 = vsel %vm129, %v417, -1e+30
    %v422 = vsel %vm130, %v418, -1e+30
    %424 = vset.pattern.permute.xlu0 0
    %425 = vperm.xlu0 %424, %v419
    %v426 = vpop.permute.xlu0 %425
    %429 = vset.pattern.permute.xlu0 0
    %430 = vperm.xlu0 %429, %v420
    %v431 = vpop.permute.xlu0 %430
    %434 = vset.pattern.permute.xlu0 0
    %435 = vperm.xlu0 %434, %v421
    %v436 = vpop.permute.xlu0 %435
    %439 = vset.pattern.permute.xlu0 0
    %440 = vperm.xlu0 %439, %v422
    %v441 = vpop.permute.xlu0 %440
    %v443 = vmul.f32 %v107, %v426
    %v444 = vmul.f32 %v108, %v431
    %v445 = vmul.f32 %v109, %v436
    %v446 = vmul.f32 %v110, %v441
    %v447 = vsel %vm135, %v443, 0.0
    %v448 = vsel %vm135, %v444, 0.0
    %v449 = vadd.f32 %v447, %v448
    %v450 = vsel %vm135, %v445, 0.0
    %v451 = vadd.f32 %v449, %v450
    %v452 = vsel %vm135, %v446, 0.0
    %v453 = vadd.f32 %v451, %v452
    %v454 = vrot.slane %v453, 4
    %v455 = vadd.f32 %v453, %v454
    %v456 = vrot.slane %v455, 2
    %v457 = vadd.f32 %v455, %v456
    %v458 = vrot.slane %v457, 1
    %v459 = vadd.f32 %v457, %v458
    %vm460 = vcmp.gt.f32.partialorder %v459, %v426
    %vm461 = vcmp.gt.f32.partialorder %v459, %v431
    %vm462 = vcmp.gt.f32.partialorder %v459, %v436
    %vm463 = vcmp.gt.f32.partialorder %v459, %v441
    %vm464 = vcmp.eq.f32.partialorder %v459, %v426
    %vm465 = vcmp.eq.f32.partialorder %v459, %v431
    %vm466 = vcmp.eq.f32.partialorder %v459, %v436
    %vm467 = vcmp.eq.f32.partialorder %v459, %v441
    %vm468 = vmand %vm464, %vm111
    %vm469 = vmand %vm465, %vm112
    %vm470 = vmand %vm466, %vm113
    %vm471 = vmand %vm467, %vm114
    %vm472 = vmor %vm460, %vm468
    %vm473 = vmor %vm461, %vm469
    %vm474 = vmor %vm462, %vm470
    %vm475 = vmor %vm463, %vm471
    %v476 = vsel %vm472, %v115, 0.0
    %v477 = vsel %vm473, %v116, 0.0
    %v478 = vsel %vm474, %v117, 0.0
    %v479 = vsel %vm475, %v118, 0.0
    %v480 = vsel %vm135, %v476, 0.0
    %481 = vadd.xlane.f32.xlu0 %v480
    %v482 = vpop.xlane.xlu0 %481
    %v483 = vsel %vm135, %v477, 0.0
    %484 = vadd.xlane.f32.xlu0 %v483
    %v485 = vpop.xlane.xlu0 %484
    %v486 = vsel %vm135, %v478, 0.0
    %487 = vadd.xlane.f32.xlu0 %v486
    %v488 = vpop.xlane.xlu0 %487
    %v489 = vsel %vm135, %v479, 0.0
    %490 = vadd.xlane.f32.xlu0 %v489
    %v491 = vpop.xlane.xlu0 %490
    %vm492 = vcmp.lt.f32.partialorder %v482, 8.0
    %vm493 = vcmp.lt.f32.partialorder %v485, 8.0
    %vm494 = vcmp.lt.f32.partialorder %v488, 8.0
    %vm495 = vcmp.lt.f32.partialorder %v491, 8.0
    %vm496 = vmand %vm492, %vm127
    %vm497 = vmand %vm493, %vm128
    %vm498 = vmand %vm494, %vm129
    %vm499 = vmand %vm495, %vm130
    %v500 = vsel %vm496, 1.0, 0.0
    %v501 = vsel %vm497, 1.0, 0.0
    %v502 = vsel %vm498, 1.0, 0.0
    %v503 = vsel %vm499, 1.0, 0.0
    %505 = vset.pattern.permute.xlu0 0
    %506 = vperm.xlu0 %505, %v415
    %v507 = vpop.permute.xlu0 %506
    %510 = vset.pattern.permute.xlu0 0
    %511 = vperm.xlu0 %510, %v416
    %v512 = vpop.permute.xlu0 %511
    %515 = vset.pattern.permute.xlu0 0
    %516 = vperm.xlu0 %515, %v417
    %v517 = vpop.permute.xlu0 %516
    %520 = vset.pattern.permute.xlu0 0
    %521 = vperm.xlu0 %520, %v418
    %v522 = vpop.permute.xlu0 %521
    %v524 = vmul.f32 %v310, %v507
    %v525 = vmul.f32 %v311, %v512
    %v526 = vmul.f32 %v312, %v517
    %v527 = vmul.f32 %v313, %v522
    %529 = vset.pattern.permute.xlu0 0
    %530 = vperm.xlu0 %529, %v500
    %v531 = vpop.permute.xlu0 %530
    %534 = vset.pattern.permute.xlu0 0
    %535 = vperm.xlu0 %534, %v501
    %v536 = vpop.permute.xlu0 %535
    %539 = vset.pattern.permute.xlu0 0
    %540 = vperm.xlu0 %539, %v502
    %v541 = vpop.permute.xlu0 %540
    %544 = vset.pattern.permute.xlu0 0
    %545 = vperm.xlu0 %544, %v503
    %v546 = vpop.permute.xlu0 %545
    %v548 = vmul.f32 %v524, %v531
    %v549 = vmul.f32 %v525, %v536
    %v550 = vmul.f32 %v526, %v541
    %v551 = vmul.f32 %v527, %v546
    %v552 = vmul.f32 %v119, %v531
    %v553 = vmul.f32 %v120, %v536
    %v554 = vmul.f32 %v121, %v541
    %v555 = vmul.f32 %v122, %v546
    %v556 = vmul.f32 %v107, %v531
    %v557 = vmul.f32 %v108, %v536
    %v558 = vmul.f32 %v109, %v541
    %v559 = vmul.f32 %v110, %v546
    %v560 = vsel %vm135, %v556, 0.0
    %v561 = vsel %vm135, %v557, 0.0
    %v562 = vadd.f32 %v560, %v561
    %v563 = vsel %vm135, %v558, 0.0
    %v564 = vadd.f32 %v562, %v563
    %v565 = vsel %vm135, %v559, 0.0
    %v566 = vadd.f32 %v564, %v565
    %v567 = vrot.slane %v566, 4
    %v568 = vadd.f32 %v566, %v567
    %v569 = vrot.slane %v568, 2
    %v570 = vadd.f32 %v568, %v569
    %v571 = vrot.slane %v570, 1
    %v572 = vadd.f32 %v570, %v571
    %v573 = vmul.f32 %v552, %v572
    %v574 = vmul.f32 %v553, %v572
    %v575 = vmul.f32 %v554, %v572
    %v576 = vmul.f32 %v555, %v572
    %v577 = vsel %vm496, 1, 0
    %v578 = vsel %vm497, 1, 0
    %v579 = vsel %vm498, 1, 0
    %v580 = vsel %vm499, 1, 0
    %581 = vset.pattern.permute.xlu0 0
    %582 = vperm.xlu0 %581, %v577
    %v583 = vpop.permute.xlu0 %582
    %584 = vset.pattern.permute.xlu0 0
    %585 = vperm.xlu0 %584, %v578
    %v586 = vpop.permute.xlu0 %585
    %587 = vset.pattern.permute.xlu0 0
    %588 = vperm.xlu0 %587, %v579
    %v589 = vpop.permute.xlu0 %588
    %590 = vset.pattern.permute.xlu0 0
    %591 = vperm.xlu0 %590, %v580
    %v592 = vpop.permute.xlu0 %591
    %vm593 = vcmp.eq.s32.totalorder %v583, 1
    %vm594 = vcmp.eq.s32.totalorder %v586, 1
    %vm595 = vcmp.eq.s32.totalorder %v589, 1
    %vm596 = vcmp.eq.s32.totalorder %v592, 1
    %v597 = vsel %vm593, %v548, -1e+30
    %v598 = vsel %vm594, %v549, -1e+30
    %v599 = vsel %vm595, %v550, -1e+30
    %v600 = vsel %vm596, %v551, -1e+30
    %v601 = vmax.f32 %v597, %v598
    %v602 = vrot.slane %v601, 4
    %v603 = vmax.f32 %v601, %v602
    %v604 = vrot.slane %v603, 2
    %v605 = vmax.f32 %v603, %v604
    %v606 = vrot.slane %v605, 1
    %v607 = vmax.f32 %v605, %v606
    %v608 = vadd.f32 %v548, %v549
    %v609 = vrot.slane %v608, 4
    %v610 = vadd.f32 %v608, %v609
    %v611 = vrot.slane %v610, 2
    %v612 = vadd.f32 %v610, %v611
    %v613 = vrot.slane %v612, 1
    %v614 = vadd.f32 %v612, %v613
    %v615 = vmul.f32 %v614, 0.125
    %v616 = vmax.f32 %v599, %v600
    %v617 = vrot.slane %v616, 4
    %v618 = vmax.f32 %v616, %v617
    %v619 = vrot.slane %v618, 2
    %v620 = vmax.f32 %v618, %v619
    %v621 = vrot.slane %v620, 1
    %v622 = vmax.f32 %v620, %v621
    %v623 = vadd.f32 %v550, %v551
    %v624 = vrot.slane %v623, 4
    %v625 = vadd.f32 %v623, %v624
    %v626 = vrot.slane %v625, 2
    %v627 = vadd.f32 %v625, %v626
    %v628 = vrot.slane %v627, 1
    %v629 = vadd.f32 %v627, %v628
    %v630 = vmul.f32 %v629, 0.125
    %v633 = vrot.slane %v622, 7
    %v634 = vrot.slane %v630, 7
    %vm637 = vcmask 1040384
    %v638 = vsel %vm637, %v607, %v633
    %v639 = vsel %vm637, %v615, %v634
    %v640 = vsel %vm135, %v573, 0.0
    %641 = vadd.xlane.f32.xlu0 %v640
    %v642 = vpop.xlane.xlu0 %641
    %v643 = vsel %vm135, %v574, 0.0
    %644 = vadd.xlane.f32.xlu0 %v643
    %v645 = vpop.xlane.xlu0 %644
    %v646 = vsel %vm135, %v575, 0.0
    %647 = vadd.xlane.f32.xlu0 %v646
    %v648 = vpop.xlane.xlu0 %647
    %v649 = vsel %vm135, %v576, 0.0
    %650 = vadd.xlane.f32.xlu0 %v649
    %v651 = vpop.xlane.xlu0 %650
    %v652 = vadd.f32 %v642, 1.0
    %v653 = vadd.f32 %v645, 1.0
    %v654 = vadd.f32 %v648, 1.0
    %v655 = vadd.f32 %v651, 1.0
    %v656 = vrsqrt.pop %v652
    %v657 = vrsqrt.pop %v653
    %v658 = vrsqrt.pop %v654
    %v659 = vrsqrt.pop %v655
    %v660 = vpack.c.bf16 %v549, %v548
    %v661 = vpack.c.bf16 %v551, %v550
    %v662 = vld [vmem:[%s6] sm:$0xff]
    %v663 = vld [vmem:[%s6 + $0x8] sm:$0xff]
    %v664 = vld [vmem:[%s6 + $0x10] sm:$0xff]
    %v665 = vld [vmem:[%s6 + $0x18] sm:$0xff]
    %v666 = vld [vmem:[%s6 + $0x20] sm:$0xff]
    %v667 = vld [vmem:[%s6 + $0x28] sm:$0xff]
    %v668 = vld [vmem:[%s6 + $0x30] sm:$0xff]
    %v669 = vld [vmem:[%s6 + $0x38] sm:$0xff]
    %v670 = vld [vmem:[%s6 + $0x40] sm:$0xff]
    %v671 = vld [vmem:[%s6 + $0x48] sm:$0xff]
    %v672 = vld [vmem:[%s6 + $0x50] sm:$0xff]
    %v673 = vld [vmem:[%s6 + $0x58] sm:$0xff]
    %v674 = vld [vmem:[%s6 + $0x60] sm:$0xff]
    %v675 = vld [vmem:[%s6 + $0x68] sm:$0xff]
    %v676 = vld [vmem:[%s6 + $0x70] sm:$0xff]
    %v677 = vld [vmem:[%s6 + $0x78] sm:$0xff]
    %v678 = vpack.c.bf16 %v663, %v662
    %v679 = vpack.c.bf16 %v665, %v664
    %v680 = vpack.c.bf16 %v667, %v666
    %v681 = vpack.c.bf16 %v669, %v668
    %v682 = vpack.c.bf16 %v671, %v670
    %v683 = vpack.c.bf16 %v673, %v672
    %v684 = vpack.c.bf16 %v675, %v674
    %v685 = vpack.c.bf16 %v677, %v676
    %686 = vmatprep.subr.bf16.mxu0 0
    %687 = vmatpush1.bf16.msra.mxu0 %v685
    %688 = vmatprep.subr.bf16.mxu0 0
    %689 = vmatpush1.bf16.msra.mxu0 %v684
    %690 = vmatprep.subr.bf16.mxu0 0
    %691 = vmatpush1.bf16.msra.mxu0 %v683
    %692 = vmatprep.subr.bf16.mxu0 0
    %693 = vmatpush1.bf16.msra.mxu0 %v682
    %694 = vmatprep.subr.bf16.mxu0 0
    %695 = vmatpush1.bf16.msra.mxu0 %v681
    %696 = vmatprep.subr.bf16.mxu0 0
    %697 = vmatpush1.bf16.msra.mxu0 %v680
    %698 = vmatprep.subr.bf16.mxu0 0
    %699 = vmatpush1.bf16.msra.mxu0 %v679
    %700 = vmatprep.subr.bf16.mxu0 0
    %701 = vmatpush1.bf16.msra.mxu0 %v678
    %702 = vmatprep.subr.bf16.mxu0 0
    %703 = vmatpush2.bf16.msra.mxu0 0
    %704 = vmatprep.subr.bf16.mxu0 0
    %705 = vmatpush2.bf16.msra.mxu0 0
    %706 = vmatprep.subr.bf16.mxu0 0
    %707 = vmatpush2.bf16.msra.mxu0 0
    %708 = vmatprep.subr.bf16.mxu0 0
    %709 = vmatpush2.bf16.msra.mxu0 0
    %710 = vmatprep.subr.bf16.mxu0 0
    %711 = vmatpush2.bf16.msra.mxu0 0
    %712 = vmatprep.subr.bf16.mxu0 0
    %713 = vmatpush2.bf16.msra.mxu0 0
    %714 = vmatprep.subr.bf16.mxu0 0
    %715 = vmatpush2.bf16.msra.mxu0 0
    %716 = vmatprep.subr.bf16.mxu0 0
    %717 = vmatpush2.bf16.msra.mxu0 0
    %718 = vmatprep.mubr.bf16.mxu0 0
    %719 = vmatmul.mubr.bf16.gmra.mxu0 %v660
    %v720 = vpop.f32.mrf.mxu0
    %v721 = vadd.f32 0.0, %v720
    %v722 = vpop.f32.mrf.mxu0
    %v723 = vpop.f32.mrf.mxu0
    %v724 = vadd.f32 0.0, %v723
    %v725 = vpop.f32.mrf.mxu0
    %726 = vmatprep.mubr.bf16.mxu0 0
    %727 = vmatmul.mubr.bf16.gmra.mxu0 %v661
    %v728 = vpop.f32.mrf.mxu0
    %v729 = vadd.f32 0.0, %v728
    %v730 = vpop.f32.mrf.mxu0
    %v731 = vpop.f32.mrf.mxu0
    %v732 = vadd.f32 0.0, %v731
    %v733 = vpop.f32.mrf.mxu0
    %734 = vdwg.mxu0
    %v735 = vpack.c.bf16 %v574, %v573
    %v736 = vpack.c.bf16 %v576, %v575
    %v737 = vmul.f32 %v656, %v721
    %v738 = vmul.f32 %v657, %v724
    %v739 = vmul.f32 %v658, %v729
    %v740 = vmul.f32 %v659, %v732
    %v741 = vpack.c.bf16 %v738, %v737
    %v742 = vpack.c.bf16 %v740, %v739
    %v744 = vsel %vm135, %v735, 0
    %v747 = vsel %vm135, %v736, 0
    %749 = vmatprep.subr.bf16.mxu0 0
    %750 = vmatpush1.bf16.msra.mxu0 0
    %751 = vmatprep.subr.bf16.mxu0 0
    %752 = vmatpush1.bf16.msra.mxu0 0
    %753 = vmatprep.subr.bf16.mxu0 0
    %754 = vmatpush1.bf16.msra.mxu0 0
    %755 = vmatprep.subr.bf16.mxu0 0
    %756 = vmatpush1.bf16.msra.mxu0 0
    %757 = vmatprep.subr.bf16.mxu0 0
    %758 = vmatpush1.bf16.msra.mxu0 0
    %759 = vmatprep.subr.bf16.mxu0 0
    %760 = vmatpush1.bf16.msra.mxu0 0
    %761 = vmatprep.subr.bf16.mxu0 0
    %762 = vmatpush1.bf16.msra.mxu0 %v742
    %763 = vmatprep.subr.bf16.mxu0 0
    %764 = vmatpush1.bf16.msra.mxu0 %v741
    %765 = vmatprep.subr.bf16.mxu0 0
    %766 = vmatpush2.bf16.msra.mxu0 0
    %767 = vmatprep.subr.bf16.mxu0 0
    %768 = vmatpush2.bf16.msra.mxu0 0
    %769 = vmatprep.subr.bf16.mxu0 0
    %770 = vmatpush2.bf16.msra.mxu0 0
    %771 = vmatprep.subr.bf16.mxu0 0
    %772 = vmatpush2.bf16.msra.mxu0 0
    %773 = vmatprep.subr.bf16.mxu0 0
    %774 = vmatpush2.bf16.msra.mxu0 0
    %775 = vmatprep.subr.bf16.mxu0 0
    %776 = vmatpush2.bf16.msra.mxu0 0
    %777 = vmatprep.subr.bf16.mxu0 0
    %778 = vmatpush2.bf16.msra.mxu0 0
    %779 = vmatprep.subr.bf16.mxu0 0
    %780 = vmatpush2.bf16.msra.mxu0 0
    %781 = vmatprep.mubr.bf16.mxu0 0
    %782 = vmatmul.mubr.bf16.gmra.mxu0 %v744
    %v783 = vpop.f32.mrf.mxu0
    %v784 = vadd.f32 0.0, %v783
    %v785 = vpop.f32.mrf.mxu0
    %v786 = vpop.f32.mrf.mxu0
    %v787 = vadd.f32 0.0, %v786
    %v788 = vpop.f32.mrf.mxu0
    %789 = vmatprep.mubr.bf16.mxu0 0
    %790 = vmatmul.mubr.bf16.gmra.mxu0 %v747
    %v791 = vpop.f32.mrf.mxu0
    %v792 = vadd.f32 0.0, %v791
    %v793 = vpop.f32.mrf.mxu0
    %v794 = vpop.f32.mrf.mxu0
    %v795 = vadd.f32 0.0, %v794
    %v796 = vpop.f32.mrf.mxu0
    %797 = vdwg.mxu0
    %v798 = vmul.f32 %v656, %v784
    %v799 = vmul.f32 %v657, %v787
    %v800 = vmul.f32 %v658, %v792
    %v801 = vmul.f32 %v659, %v795
    %v802 = vmul.f32 %v656, %v656
    %v803 = vmul.f32 %v657, %v657
    %v804 = vmul.f32 %v658, %v658
    %v805 = vmul.f32 %v659, %v659
    %v806 = vmul.f32 %v802, %v721
    %v807 = vmul.f32 %v803, %v724
    %v808 = vmul.f32 %v804, %v729
    %v809 = vmul.f32 %v805, %v732
    %v810 = vadd.f32 %v798, %v806
    %v811 = vadd.f32 %v799, %v807
    %v812 = vadd.f32 %v800, %v808
    %v813 = vadd.f32 %v801, %v809
    %v814 = vld [vmem:[%s7] sm:$0x1]
    %v816 = vlaneseq
    %v817 = vshrl.u32 %v816, 7
    %v818 = vsub.s32 0, %v817
    %v819 = vrot.slane %v814, %v818
    %v821 = vadd.f32 %v810, %v819
    %v822 = vadd.f32 %v811, %v819
    %v823 = vadd.f32 %v812, %v819
    %v824 = vadd.f32 %v813, %v819
    %v825 = vmax.f32 %v821, 0.0
    %v826 = vmax.f32 %v822, 0.0
    %v827 = vmax.f32 %v823, 0.0
    %v828 = vmax.f32 %v824, 0.0
    %v829 = vld [vmem:[%s11] sm:$0xff]
    %v830 = vld [vmem:[%s11 + $0x8] sm:$0xff]
    %v831 = vld [vmem:[%s11 + $0x10] sm:$0xff]
    %v832 = vld [vmem:[%s11 + $0x18] sm:$0xff]
    %v833 = vld [vmem:[%s11 + $0x20] sm:$0xff]
    %v834 = vld [vmem:[%s11 + $0x28] sm:$0xff]
    %v835 = vld [vmem:[%s11 + $0x30] sm:$0xff]
    %v836 = vld [vmem:[%s11 + $0x38] sm:$0xff]
    %v837 = vld [vmem:[%s11 + $0x40] sm:$0xff]
    %v838 = vld [vmem:[%s11 + $0x48] sm:$0xff]
    %v839 = vld [vmem:[%s11 + $0x50] sm:$0xff]
    %v840 = vld [vmem:[%s11 + $0x58] sm:$0xff]
    %v841 = vld [vmem:[%s11 + $0x60] sm:$0xff]
    %v842 = vld [vmem:[%s11 + $0x68] sm:$0xff]
    %v843 = vld [vmem:[%s11 + $0x70] sm:$0xff]
    %v844 = vld [vmem:[%s11 + $0x78] sm:$0xff]
    %845 = vmatprep.subr.mxu0 0.0
    %846 = vmatpush1.msra.mxu0 %v844
    %847 = vmatprep.subr.mxu0 0.0
    %848 = vmatpush1.msra.mxu0 %v843
    %849 = vmatprep.subr.mxu0 0.0
    %850 = vmatpush1.msra.mxu0 %v842
    %851 = vmatprep.subr.mxu0 0.0
    %852 = vmatpush1.msra.mxu0 %v841
    %853 = vmatprep.subr.mxu0 0.0
    %854 = vmatpush1.msra.mxu0 %v840
    %855 = vmatprep.subr.mxu0 0.0
    %856 = vmatpush1.msra.mxu0 %v839
    %857 = vmatprep.subr.mxu0 0.0
    %858 = vmatpush1.msra.mxu0 %v838
    %859 = vmatprep.subr.mxu0 0.0
    %860 = vmatpush1.msra.mxu0 %v837
    %861 = vmatprep.subr.mxu0 0.0
    %862 = vmatpush1.msra.mxu0 %v836
    %863 = vmatprep.subr.mxu0 0.0
    %864 = vmatpush1.msra.mxu0 %v835
    %865 = vmatprep.subr.mxu0 0.0
    %866 = vmatpush1.msra.mxu0 %v834
    %867 = vmatprep.subr.mxu0 0.0
    %868 = vmatpush1.msra.mxu0 %v833
    %869 = vmatprep.subr.mxu0 0.0
    %870 = vmatpush1.msra.mxu0 %v832
    %871 = vmatprep.subr.mxu0 0.0
    %872 = vmatpush1.msra.mxu0 %v831
    %873 = vmatprep.subr.mxu0 0.0
    %874 = vmatpush1.msra.mxu0 %v830
    %875 = vmatprep.subr.mxu0 0.0
    %876 = vmatpush1.msra.mxu0 %v829
    %877 = vmatprep.subr.mxu0 0.0
    %878 = vmatpush2.msra.mxu0 0.0
    %879 = vmatprep.subr.mxu0 0.0
    %880 = vmatpush2.msra.mxu0 0.0
    %881 = vmatprep.subr.mxu0 0.0
    %882 = vmatpush2.msra.mxu0 0.0
    %883 = vmatprep.subr.mxu0 0.0
    %884 = vmatpush2.msra.mxu0 0.0
    %885 = vmatprep.subr.mxu0 0.0
    %886 = vmatpush2.msra.mxu0 0.0
    %887 = vmatprep.subr.mxu0 0.0
    %888 = vmatpush2.msra.mxu0 0.0
    %889 = vmatprep.subr.mxu0 0.0
    %890 = vmatpush2.msra.mxu0 0.0
    %891 = vmatprep.subr.mxu0 0.0
    %892 = vmatpush2.msra.mxu0 0.0
    %893 = vmatprep.subr.mxu0 0.0
    %894 = vmatpush2.msra.mxu0 0.0
    %895 = vmatprep.subr.mxu0 0.0
    %896 = vmatpush2.msra.mxu0 0.0
    %897 = vmatprep.subr.mxu0 0.0
    %898 = vmatpush2.msra.mxu0 0.0
    %899 = vmatprep.subr.mxu0 0.0
    %900 = vmatpush2.msra.mxu0 0.0
    %901 = vmatprep.subr.mxu0 0.0
    %902 = vmatpush2.msra.mxu0 0.0
    %903 = vmatprep.subr.mxu0 0.0
    %904 = vmatpush2.msra.mxu0 0.0
    %905 = vmatprep.subr.mxu0 0.0
    %906 = vmatpush2.msra.mxu0 0.0
    %907 = vmatprep.subr.mxu0 0.0
    %908 = vmatpush2.msra.mxu0 0.0
    %909 = vmatprep.mubr.f32.mxu0 0.0
    %910 = vmatmul.mubr.f32.gmra.mxu0 %v825
    %v911 = vpop.f32.mrf.mxu0
    %v912 = vadd.f32 0.0, %v911
    %v913 = vpop.f32.mrf.mxu0
    %914 = vmatprep.mubr.f32.mxu0 0.0
    %915 = vmatmul.mubr.f32.gmra.mxu0 %v826
    %v916 = vpop.f32.mrf.mxu0
    %v917 = vadd.f32 0.0, %v916
    %v918 = vpop.f32.mrf.mxu0
    %919 = vmatprep.mubr.f32.mxu0 0.0
    %920 = vmatmul.mubr.f32.gmra.mxu0 %v827
    %v921 = vpop.f32.mrf.mxu0
    %v922 = vadd.f32 0.0, %v921
    %v923 = vpop.f32.mrf.mxu0
    %924 = vmatprep.mubr.f32.mxu0 0.0
    %925 = vmatmul.mubr.f32.gmra.mxu0 %v828
    %v926 = vpop.f32.mrf.mxu0
    %v927 = vadd.f32 0.0, %v926
    %v928 = vpop.f32.mrf.mxu0
    %929 = vdwg.mxu0
    %v930 = vtanh.pop %v912
    %v931 = vtanh.pop %v917
    %v932 = vtanh.pop %v922
    %v933 = vtanh.pop %v927
    %v934 = vsel %vm496, %v930, -1e+30
    %v935 = vsel %vm497, %v931, -1e+30
    %v936 = vsel %vm498, %v932, -1e+30
    %v937 = vsel %vm499, %v933, -1e+30
    %939 = vset.pattern.permute.xlu0 0
    %940 = vperm.xlu0 %939, %v934
    %v941 = vpop.permute.xlu0 %940
    %944 = vset.pattern.permute.xlu0 0
    %945 = vperm.xlu0 %944, %v935
    %v946 = vpop.permute.xlu0 %945
    %949 = vset.pattern.permute.xlu0 0
    %950 = vperm.xlu0 %949, %v936
    %v951 = vpop.permute.xlu0 %950
    %954 = vset.pattern.permute.xlu0 0
    %955 = vperm.xlu0 %954, %v937
    %v956 = vpop.permute.xlu0 %955
    %v958 = vmul.f32 %v107, %v941
    %v959 = vmul.f32 %v108, %v946
    %v960 = vmul.f32 %v109, %v951
    %v961 = vmul.f32 %v110, %v956
    %v962 = vsel %vm135, %v958, 0.0
    %v963 = vsel %vm135, %v959, 0.0
    %v964 = vadd.f32 %v962, %v963
    %v965 = vsel %vm135, %v960, 0.0
    %v966 = vadd.f32 %v964, %v965
    %v967 = vsel %vm135, %v961, 0.0
    %v968 = vadd.f32 %v966, %v967
    %v969 = vrot.slane %v968, 4
    %v970 = vadd.f32 %v968, %v969
    %v971 = vrot.slane %v970, 2
    %v972 = vadd.f32 %v970, %v971
    %v973 = vrot.slane %v972, 1
    %v974 = vadd.f32 %v972, %v973
    %vm975 = vcmp.gt.f32.partialorder %v974, %v941
    %vm976 = vcmp.gt.f32.partialorder %v974, %v946
    %vm977 = vcmp.gt.f32.partialorder %v974, %v951
    %vm978 = vcmp.gt.f32.partialorder %v974, %v956
    %vm979 = vcmp.eq.f32.partialorder %v974, %v941
    %vm980 = vcmp.eq.f32.partialorder %v974, %v946
    %vm981 = vcmp.eq.f32.partialorder %v974, %v951
    %vm982 = vcmp.eq.f32.partialorder %v974, %v956
    %vm983 = vmand %vm979, %vm111
    %vm984 = vmand %vm980, %vm112
    %vm985 = vmand %vm981, %vm113
    %vm986 = vmand %vm982, %vm114
    %vm987 = vmor %vm975, %vm983
    %vm988 = vmor %vm976, %vm984
    %vm989 = vmor %vm977, %vm985
    %vm990 = vmor %vm978, %vm986
    %v991 = vsel %vm987, %v115, 0.0
    %v992 = vsel %vm988, %v116, 0.0
    %v993 = vsel %vm989, %v117, 0.0
    %v994 = vsel %vm990, %v118, 0.0
    %v995 = vsel %vm135, %v991, 0.0
    %996 = vadd.xlane.f32.xlu0 %v995
    %v997 = vpop.xlane.xlu0 %996
    %v998 = vsel %vm135, %v992, 0.0
    %999 = vadd.xlane.f32.xlu0 %v998
    %v1000 = vpop.xlane.xlu0 %999
    %v1001 = vsel %vm135, %v993, 0.0
    %1002 = vadd.xlane.f32.xlu0 %v1001
    %v1003 = vpop.xlane.xlu0 %1002
    %v1004 = vsel %vm135, %v994, 0.0
    %1005 = vadd.xlane.f32.xlu0 %v1004
    %v1006 = vpop.xlane.xlu0 %1005
    %vm1007 = vcmp.lt.f32.partialorder %v997, 7.0
    %vm1008 = vcmp.lt.f32.partialorder %v1000, 7.0
    %vm1009 = vcmp.lt.f32.partialorder %v1003, 7.0
    %vm1010 = vcmp.lt.f32.partialorder %v1006, 7.0
    %vm1011 = vmand %vm1007, %vm496
    %vm1012 = vmand %vm1008, %vm497
    %vm1013 = vmand %vm1009, %vm498
    %vm1014 = vmand %vm1010, %vm499
    %v1015 = vsel %vm1011, 1.0, 0.0
    %v1016 = vsel %vm1012, 1.0, 0.0
    %v1017 = vsel %vm1013, 1.0, 0.0
    %v1018 = vsel %vm1014, 1.0, 0.0
    %1020 = vset.pattern.permute.xlu0 0
    %1021 = vperm.xlu0 %1020, %v930
    %v1022 = vpop.permute.xlu0 %1021
    %1025 = vset.pattern.permute.xlu0 0
    %1026 = vperm.xlu0 %1025, %v931
    %v1027 = vpop.permute.xlu0 %1026
    %1030 = vset.pattern.permute.xlu0 0
    %1031 = vperm.xlu0 %1030, %v932
    %v1032 = vpop.permute.xlu0 %1031
    %1035 = vset.pattern.permute.xlu0 0
    %1036 = vperm.xlu0 %1035, %v933
    %v1037 = vpop.permute.xlu0 %1036
    %v1039 = vmul.f32 %v825, %v1022
    %v1040 = vmul.f32 %v826, %v1027
    %v1041 = vmul.f32 %v827, %v1032
    %v1042 = vmul.f32 %v828, %v1037
    %1044 = vset.pattern.permute.xlu0 0
    %1045 = vperm.xlu0 %1044, %v1015
    %v1046 = vpop.permute.xlu0 %1045
    %1049 = vset.pattern.permute.xlu0 0
    %1050 = vperm.xlu0 %1049, %v1016
    %v1051 = vpop.permute.xlu0 %1050
    %1054 = vset.pattern.permute.xlu0 0
    %1055 = vperm.xlu0 %1054, %v1017
    %v1056 = vpop.permute.xlu0 %1055
    %1059 = vset.pattern.permute.xlu0 0
    %1060 = vperm.xlu0 %1059, %v1018
    %v1061 = vpop.permute.xlu0 %1060
    %v1063 = vmul.f32 %v1039, %v1046
    %v1064 = vmul.f32 %v1040, %v1051
    %v1065 = vmul.f32 %v1041, %v1056
    %v1066 = vmul.f32 %v1042, %v1061
    %v1067 = vmul.f32 %v573, %v1046
    %v1068 = vmul.f32 %v574, %v1051
    %v1069 = vmul.f32 %v575, %v1056
    %v1070 = vmul.f32 %v576, %v1061
    %v1071 = vmul.f32 %v107, %v1046
    %v1072 = vmul.f32 %v108, %v1051
    %v1073 = vmul.f32 %v109, %v1056
    %v1074 = vmul.f32 %v110, %v1061
    %v1075 = vsel %vm135, %v1071, 0.0
    %v1076 = vsel %vm135, %v1072, 0.0
    %v1077 = vadd.f32 %v1075, %v1076
    %v1078 = vsel %vm135, %v1073, 0.0
    %v1079 = vadd.f32 %v1077, %v1078
    %v1080 = vsel %vm135, %v1074, 0.0
    %v1081 = vadd.f32 %v1079, %v1080
    %v1082 = vrot.slane %v1081, 4
    %v1083 = vadd.f32 %v1081, %v1082
    %v1084 = vrot.slane %v1083, 2
    %v1085 = vadd.f32 %v1083, %v1084
    %v1086 = vrot.slane %v1085, 1
    %v1087 = vadd.f32 %v1085, %v1086
    %v1088 = vmul.f32 %v1067, %v1087
    %v1089 = vmul.f32 %v1068, %v1087
    %v1090 = vmul.f32 %v1069, %v1087
    %v1091 = vmul.f32 %v1070, %v1087
    %v1092 = vsel %vm1011, 1, 0
    %v1093 = vsel %vm1012, 1, 0
    %v1094 = vsel %vm1013, 1, 0
    %v1095 = vsel %vm1014, 1, 0
    %1096 = vset.pattern.permute.xlu0 0
    %1097 = vperm.xlu0 %1096, %v1092
    %v1098 = vpop.permute.xlu0 %1097
    %1099 = vset.pattern.permute.xlu0 0
    %1100 = vperm.xlu0 %1099, %v1093
    %v1101 = vpop.permute.xlu0 %1100
    %1102 = vset.pattern.permute.xlu0 0
    %1103 = vperm.xlu0 %1102, %v1094
    %v1104 = vpop.permute.xlu0 %1103
    %1105 = vset.pattern.permute.xlu0 0
    %1106 = vperm.xlu0 %1105, %v1095
    %v1107 = vpop.permute.xlu0 %1106
    %vm1108 = vcmp.eq.s32.totalorder %v1098, 1
    %vm1109 = vcmp.eq.s32.totalorder %v1101, 1
    %vm1110 = vcmp.eq.s32.totalorder %v1104, 1
    %vm1111 = vcmp.eq.s32.totalorder %v1107, 1
    %v1112 = vsel %vm1108, %v1063, -1e+30
    %v1113 = vsel %vm1109, %v1064, -1e+30
    %v1114 = vsel %vm1110, %v1065, -1e+30
    %v1115 = vsel %vm1111, %v1066, -1e+30
    %v1116 = vmax.f32 %v1112, %v1113
    %v1117 = vrot.slane %v1116, 4
    %v1118 = vmax.f32 %v1116, %v1117
    %v1119 = vrot.slane %v1118, 2
    %v1120 = vmax.f32 %v1118, %v1119
    %v1121 = vrot.slane %v1120, 1
    %v1122 = vmax.f32 %v1120, %v1121
    %v1123 = vadd.f32 %v1063, %v1064
    %v1124 = vrot.slane %v1123, 4
    %v1125 = vadd.f32 %v1123, %v1124
    %v1126 = vrot.slane %v1125, 2
    %v1127 = vadd.f32 %v1125, %v1126
    %v1128 = vrot.slane %v1127, 1
    %v1129 = vadd.f32 %v1127, %v1128
    %v1130 = vmul.f32 %v1129, 0.14285715
    %v1131 = vmax.f32 %v1114, %v1115
    %v1132 = vrot.slane %v1131, 4
    %v1133 = vmax.f32 %v1131, %v1132
    %v1134 = vrot.slane %v1133, 2
    %v1135 = vmax.f32 %v1133, %v1134
    %v1136 = vrot.slane %v1135, 1
    %v1137 = vmax.f32 %v1135, %v1136
    %v1138 = vadd.f32 %v1065, %v1066
    %v1139 = vrot.slane %v1138, 4
    %v1140 = vadd.f32 %v1138, %v1139
    %v1141 = vrot.slane %v1140, 2
    %v1142 = vadd.f32 %v1140, %v1141
    %v1143 = vrot.slane %v1142, 1
    %v1144 = vadd.f32 %v1142, %v1143
    %v1145 = vmul.f32 %v1144, 0.14285715
    %v1148 = vrot.slane %v1137, 7
    %v1149 = vrot.slane %v1145, 7
    %v1152 = vsel %vm637, %v1122, %v1148
    %v1153 = vsel %vm637, %v1130, %v1149
    %v1154 = vsel %vm135, %v1088, 0.0
    %1155 = vadd.xlane.f32.xlu0 %v1154
    %v1156 = vpop.xlane.xlu0 %1155
    %v1157 = vsel %vm135, %v1089, 0.0
    %1158 = vadd.xlane.f32.xlu0 %v1157
    %v1159 = vpop.xlane.xlu0 %1158
    %v1160 = vsel %vm135, %v1090, 0.0
    %1161 = vadd.xlane.f32.xlu0 %v1160
    %v1162 = vpop.xlane.xlu0 %1161
    %v1163 = vsel %vm135, %v1091, 0.0
    %1164 = vadd.xlane.f32.xlu0 %v1163
    %v1165 = vpop.xlane.xlu0 %1164
    %v1166 = vadd.f32 %v1156, 1.0
    %v1167 = vadd.f32 %v1159, 1.0
    %v1168 = vadd.f32 %v1162, 1.0
    %v1169 = vadd.f32 %v1165, 1.0
    %v1170 = vrsqrt.pop %v1166
    %v1171 = vrsqrt.pop %v1167
    %v1172 = vrsqrt.pop %v1168
    %v1173 = vrsqrt.pop %v1169
    %v1174 = vpack.c.bf16 %v1064, %v1063
    %v1175 = vpack.c.bf16 %v1066, %v1065
    %v1176 = vld [vmem:[%s8] sm:$0xff]
    %v1177 = vld [vmem:[%s8 + $0x8] sm:$0xff]
    %v1178 = vld [vmem:[%s8 + $0x10] sm:$0xff]
    %v1179 = vld [vmem:[%s8 + $0x18] sm:$0xff]
    %v1180 = vld [vmem:[%s8 + $0x20] sm:$0xff]
    %v1181 = vld [vmem:[%s8 + $0x28] sm:$0xff]
    %v1182 = vld [vmem:[%s8 + $0x30] sm:$0xff]
    %v1183 = vld [vmem:[%s8 + $0x38] sm:$0xff]
    %v1184 = vld [vmem:[%s8 + $0x40] sm:$0xff]
    %v1185 = vld [vmem:[%s8 + $0x48] sm:$0xff]
    %v1186 = vld [vmem:[%s8 + $0x50] sm:$0xff]
    %v1187 = vld [vmem:[%s8 + $0x58] sm:$0xff]
    %v1188 = vld [vmem:[%s8 + $0x60] sm:$0xff]
    %v1189 = vld [vmem:[%s8 + $0x68] sm:$0xff]
    %v1190 = vld [vmem:[%s8 + $0x70] sm:$0xff]
    %v1191 = vld [vmem:[%s8 + $0x78] sm:$0xff]
    %v1192 = vpack.c.bf16 %v1177, %v1176
    %v1193 = vpack.c.bf16 %v1179, %v1178
    %v1194 = vpack.c.bf16 %v1181, %v1180
    %v1195 = vpack.c.bf16 %v1183, %v1182
    %v1196 = vpack.c.bf16 %v1185, %v1184
    %v1197 = vpack.c.bf16 %v1187, %v1186
    %v1198 = vpack.c.bf16 %v1189, %v1188
    %v1199 = vpack.c.bf16 %v1191, %v1190
    %1200 = vmatprep.subr.bf16.mxu0 0
    %1201 = vmatpush1.bf16.msra.mxu0 %v1199
    %1202 = vmatprep.subr.bf16.mxu0 0
    %1203 = vmatpush1.bf16.msra.mxu0 %v1198
    %1204 = vmatprep.subr.bf16.mxu0 0
    %1205 = vmatpush1.bf16.msra.mxu0 %v1197
    %1206 = vmatprep.subr.bf16.mxu0 0
    %1207 = vmatpush1.bf16.msra.mxu0 %v1196
    %1208 = vmatprep.subr.bf16.mxu0 0
    %1209 = vmatpush1.bf16.msra.mxu0 %v1195
    %1210 = vmatprep.subr.bf16.mxu0 0
    %1211 = vmatpush1.bf16.msra.mxu0 %v1194
    %1212 = vmatprep.subr.bf16.mxu0 0
    %1213 = vmatpush1.bf16.msra.mxu0 %v1193
    %1214 = vmatprep.subr.bf16.mxu0 0
    %1215 = vmatpush1.bf16.msra.mxu0 %v1192
    %1216 = vmatprep.subr.bf16.mxu0 0
    %1217 = vmatpush2.bf16.msra.mxu0 0
    %1218 = vmatprep.subr.bf16.mxu0 0
    %1219 = vmatpush2.bf16.msra.mxu0 0
    %1220 = vmatprep.subr.bf16.mxu0 0
    %1221 = vmatpush2.bf16.msra.mxu0 0
    %1222 = vmatprep.subr.bf16.mxu0 0
    %1223 = vmatpush2.bf16.msra.mxu0 0
    %1224 = vmatprep.subr.bf16.mxu0 0
    %1225 = vmatpush2.bf16.msra.mxu0 0
    %1226 = vmatprep.subr.bf16.mxu0 0
    %1227 = vmatpush2.bf16.msra.mxu0 0
    %1228 = vmatprep.subr.bf16.mxu0 0
    %1229 = vmatpush2.bf16.msra.mxu0 0
    %1230 = vmatprep.subr.bf16.mxu0 0
    %1231 = vmatpush2.bf16.msra.mxu0 0
    %1232 = vmatprep.mubr.bf16.mxu0 0
    %1233 = vmatmul.mubr.bf16.gmra.mxu0 %v1174
    %v1234 = vpop.f32.mrf.mxu0
    %v1235 = vadd.f32 0.0, %v1234
    %v1236 = vpop.f32.mrf.mxu0
    %v1237 = vpop.f32.mrf.mxu0
    %v1238 = vadd.f32 0.0, %v1237
    %v1239 = vpop.f32.mrf.mxu0
    %1240 = vmatprep.mubr.bf16.mxu0 0
    %1241 = vmatmul.mubr.bf16.gmra.mxu0 %v1175
    %v1242 = vpop.f32.mrf.mxu0
    %v1243 = vadd.f32 0.0, %v1242
    %v1244 = vpop.f32.mrf.mxu0
    %v1245 = vpop.f32.mrf.mxu0
    %v1246 = vadd.f32 0.0, %v1245
    %v1247 = vpop.f32.mrf.mxu0
    %1248 = vdwg.mxu0
    %v1249 = vpack.c.bf16 %v1089, %v1088
    %v1250 = vpack.c.bf16 %v1091, %v1090
    %v1251 = vmul.f32 %v1170, %v1235
    %v1252 = vmul.f32 %v1171, %v1238
    %v1253 = vmul.f32 %v1172, %v1243
    %v1254 = vmul.f32 %v1173, %v1246
    %v1255 = vpack.c.bf16 %v1252, %v1251
    %v1256 = vpack.c.bf16 %v1254, %v1253
    %v1258 = vsel %vm135, %v1249, 0
    %v1261 = vsel %vm135, %v1250, 0
    %1263 = vmatprep.subr.bf16.mxu0 0
    %1264 = vmatpush1.bf16.msra.mxu0 0
    %1265 = vmatprep.subr.bf16.mxu0 0
    %1266 = vmatpush1.bf16.msra.mxu0 0
    %1267 = vmatprep.subr.bf16.mxu0 0
    %1268 = vmatpush1.bf16.msra.mxu0 0
    %1269 = vmatprep.subr.bf16.mxu0 0
    %1270 = vmatpush1.bf16.msra.mxu0 0
    %1271 = vmatprep.subr.bf16.mxu0 0
    %1272 = vmatpush1.bf16.msra.mxu0 0
    %1273 = vmatprep.subr.bf16.mxu0 0
    %1274 = vmatpush1.bf16.msra.mxu0 0
    %1275 = vmatprep.subr.bf16.mxu0 0
    %1276 = vmatpush1.bf16.msra.mxu0 %v1256
    %1277 = vmatprep.subr.bf16.mxu0 0
    %1278 = vmatpush1.bf16.msra.mxu0 %v1255
    %1279 = vmatprep.subr.bf16.mxu0 0
    %1280 = vmatpush2.bf16.msra.mxu0 0
    %1281 = vmatprep.subr.bf16.mxu0 0
    %1282 = vmatpush2.bf16.msra.mxu0 0
    %1283 = vmatprep.subr.bf16.mxu0 0
    %1284 = vmatpush2.bf16.msra.mxu0 0
    %1285 = vmatprep.subr.bf16.mxu0 0
    %1286 = vmatpush2.bf16.msra.mxu0 0
    %1287 = vmatprep.subr.bf16.mxu0 0
    %1288 = vmatpush2.bf16.msra.mxu0 0
    %1289 = vmatprep.subr.bf16.mxu0 0
    %1290 = vmatpush2.bf16.msra.mxu0 0
    %1291 = vmatprep.subr.bf16.mxu0 0
    %1292 = vmatpush2.bf16.msra.mxu0 0
    %1293 = vmatprep.subr.bf16.mxu0 0
    %1294 = vmatpush2.bf16.msra.mxu0 0
    %1295 = vmatprep.mubr.bf16.mxu0 0
    %1296 = vmatmul.mubr.bf16.gmra.mxu0 %v1258
    %v1297 = vpop.f32.mrf.mxu0
    %v1298 = vadd.f32 0.0, %v1297
    %v1299 = vpop.f32.mrf.mxu0
    %v1300 = vpop.f32.mrf.mxu0
    %v1301 = vadd.f32 0.0, %v1300
    %v1302 = vpop.f32.mrf.mxu0
    %1303 = vmatprep.mubr.bf16.mxu0 0
    %1304 = vmatmul.mubr.bf16.gmra.mxu0 %v1261
    %v1305 = vpop.f32.mrf.mxu0
    %v1306 = vadd.f32 0.0, %v1305
    %v1307 = vpop.f32.mrf.mxu0
    %v1308 = vpop.f32.mrf.mxu0
    %v1309 = vadd.f32 0.0, %v1308
    %v1310 = vpop.f32.mrf.mxu0
    %1311 = vdwg.mxu0
    %v1312 = vmul.f32 %v1170, %v1298
    %v1313 = vmul.f32 %v1171, %v1301
    %v1314 = vmul.f32 %v1172, %v1306
    %v1315 = vmul.f32 %v1173, %v1309
    %v1316 = vmul.f32 %v1170, %v1170
    %v1317 = vmul.f32 %v1171, %v1171
    %v1318 = vmul.f32 %v1172, %v1172
    %v1319 = vmul.f32 %v1173, %v1173
    %v1320 = vmul.f32 %v1316, %v1235
    %v1321 = vmul.f32 %v1317, %v1238
    %v1322 = vmul.f32 %v1318, %v1243
    %v1323 = vmul.f32 %v1319, %v1246
    %v1324 = vadd.f32 %v1312, %v1320
    %v1325 = vadd.f32 %v1313, %v1321
    %v1326 = vadd.f32 %v1314, %v1322
    %v1327 = vadd.f32 %v1315, %v1323
    %v1328 = vld [vmem:[%s9] sm:$0x1]
    %v1330 = vlaneseq
    %v1331 = vshrl.u32 %v1330, 7
    %v1332 = vsub.s32 0, %v1331
    %v1333 = vrot.slane %v1328, %v1332
    %v1335 = vadd.f32 %v1324, %v1333
    %v1336 = vadd.f32 %v1325, %v1333
    %v1337 = vadd.f32 %v1326, %v1333
    %v1338 = vadd.f32 %v1327, %v1333
    %v1339 = vmax.f32 %v1335, 0.0
    %v1340 = vmax.f32 %v1336, 0.0
    %v1341 = vmax.f32 %v1337, 0.0
    %v1342 = vmax.f32 %v1338, 0.0
    %v1343 = vld [vmem:[%s12] sm:$0xff]
    %v1344 = vld [vmem:[%s12 + $0x8] sm:$0xff]
    %v1345 = vld [vmem:[%s12 + $0x10] sm:$0xff]
    %v1346 = vld [vmem:[%s12 + $0x18] sm:$0xff]
    %v1347 = vld [vmem:[%s12 + $0x20] sm:$0xff]
    %v1348 = vld [vmem:[%s12 + $0x28] sm:$0xff]
    %v1349 = vld [vmem:[%s12 + $0x30] sm:$0xff]
    %v1350 = vld [vmem:[%s12 + $0x38] sm:$0xff]
    %v1351 = vld [vmem:[%s12 + $0x40] sm:$0xff]
    %v1352 = vld [vmem:[%s12 + $0x48] sm:$0xff]
    %v1353 = vld [vmem:[%s12 + $0x50] sm:$0xff]
    %v1354 = vld [vmem:[%s12 + $0x58] sm:$0xff]
    %v1355 = vld [vmem:[%s12 + $0x60] sm:$0xff]
    %v1356 = vld [vmem:[%s12 + $0x68] sm:$0xff]
    %v1357 = vld [vmem:[%s12 + $0x70] sm:$0xff]
    %v1358 = vld [vmem:[%s12 + $0x78] sm:$0xff]
    %1359 = vmatprep.subr.mxu0 0.0
    %1360 = vmatpush1.msra.mxu0 %v1358
    %1361 = vmatprep.subr.mxu0 0.0
    %1362 = vmatpush1.msra.mxu0 %v1357
    %1363 = vmatprep.subr.mxu0 0.0
    %1364 = vmatpush1.msra.mxu0 %v1356
    %1365 = vmatprep.subr.mxu0 0.0
    %1366 = vmatpush1.msra.mxu0 %v1355
    %1367 = vmatprep.subr.mxu0 0.0
    %1368 = vmatpush1.msra.mxu0 %v1354
    %1369 = vmatprep.subr.mxu0 0.0
    %1370 = vmatpush1.msra.mxu0 %v1353
    %1371 = vmatprep.subr.mxu0 0.0
    %1372 = vmatpush1.msra.mxu0 %v1352
    %1373 = vmatprep.subr.mxu0 0.0
    %1374 = vmatpush1.msra.mxu0 %v1351
    %1375 = vmatprep.subr.mxu0 0.0
    %1376 = vmatpush1.msra.mxu0 %v1350
    %1377 = vmatprep.subr.mxu0 0.0
    %1378 = vmatpush1.msra.mxu0 %v1349
    %1379 = vmatprep.subr.mxu0 0.0
    %1380 = vmatpush1.msra.mxu0 %v1348
    %1381 = vmatprep.subr.mxu0 0.0
    %1382 = vmatpush1.msra.mxu0 %v1347
    %1383 = vmatprep.subr.mxu0 0.0
    %1384 = vmatpush1.msra.mxu0 %v1346
    %1385 = vmatprep.subr.mxu0 0.0
    %1386 = vmatpush1.msra.mxu0 %v1345
    %1387 = vmatprep.subr.mxu0 0.0
    %1388 = vmatpush1.msra.mxu0 %v1344
    %1389 = vmatprep.subr.mxu0 0.0
    %1390 = vmatpush1.msra.mxu0 %v1343
    %1391 = vmatprep.subr.mxu0 0.0
    %1392 = vmatpush2.msra.mxu0 0.0
    %1393 = vmatprep.subr.mxu0 0.0
    %1394 = vmatpush2.msra.mxu0 0.0
    %1395 = vmatprep.subr.mxu0 0.0
    %1396 = vmatpush2.msra.mxu0 0.0
    %1397 = vmatprep.subr.mxu0 0.0
    %1398 = vmatpush2.msra.mxu0 0.0
    %1399 = vmatprep.subr.mxu0 0.0
    %1400 = vmatpush2.msra.mxu0 0.0
    %1401 = vmatprep.subr.mxu0 0.0
    %1402 = vmatpush2.msra.mxu0 0.0
    %1403 = vmatprep.subr.mxu0 0.0
    %1404 = vmatpush2.msra.mxu0 0.0
    %1405 = vmatprep.subr.mxu0 0.0
    %1406 = vmatpush2.msra.mxu0 0.0
    %1407 = vmatprep.subr.mxu0 0.0
    %1408 = vmatpush2.msra.mxu0 0.0
    %1409 = vmatprep.subr.mxu0 0.0
    %1410 = vmatpush2.msra.mxu0 0.0
    %1411 = vmatprep.subr.mxu0 0.0
    %1412 = vmatpush2.msra.mxu0 0.0
    %1413 = vmatprep.subr.mxu0 0.0
    %1414 = vmatpush2.msra.mxu0 0.0
    %1415 = vmatprep.subr.mxu0 0.0
    %1416 = vmatpush2.msra.mxu0 0.0
    %1417 = vmatprep.subr.mxu0 0.0
    %1418 = vmatpush2.msra.mxu0 0.0
    %1419 = vmatprep.subr.mxu0 0.0
    %1420 = vmatpush2.msra.mxu0 0.0
    %1421 = vmatprep.subr.mxu0 0.0
    %1422 = vmatpush2.msra.mxu0 0.0
    %1423 = vmatprep.mubr.f32.mxu0 0.0
    %1424 = vmatmul.mubr.f32.gmra.mxu0 %v1339
    %v1425 = vpop.f32.mrf.mxu0
    %v1426 = vadd.f32 0.0, %v1425
    %v1427 = vpop.f32.mrf.mxu0
    %1428 = vmatprep.mubr.f32.mxu0 0.0
    %1429 = vmatmul.mubr.f32.gmra.mxu0 %v1340
    %v1430 = vpop.f32.mrf.mxu0
    %v1431 = vadd.f32 0.0, %v1430
    %v1432 = vpop.f32.mrf.mxu0
    %1433 = vmatprep.mubr.f32.mxu0 0.0
    %1434 = vmatmul.mubr.f32.gmra.mxu0 %v1341
    %v1435 = vpop.f32.mrf.mxu0
    %v1436 = vadd.f32 0.0, %v1435
    %v1437 = vpop.f32.mrf.mxu0
    %1438 = vmatprep.mubr.f32.mxu0 0.0
    %1439 = vmatmul.mubr.f32.gmra.mxu0 %v1342
    %v1440 = vpop.f32.mrf.mxu0
    %v1441 = vadd.f32 0.0, %v1440
    %v1442 = vpop.f32.mrf.mxu0
    %1443 = vdwg.mxu0
    %v1444 = vtanh.pop %v1426
    %v1445 = vtanh.pop %v1431
    %v1446 = vtanh.pop %v1436
    %v1447 = vtanh.pop %v1441
    %v1448 = vsel %vm1011, %v1444, -1e+30
    %v1449 = vsel %vm1012, %v1445, -1e+30
    %v1450 = vsel %vm1013, %v1446, -1e+30
    %v1451 = vsel %vm1014, %v1447, -1e+30
    %1453 = vset.pattern.permute.xlu0 0
    %1454 = vperm.xlu0 %1453, %v1448
    %v1455 = vpop.permute.xlu0 %1454
    %1458 = vset.pattern.permute.xlu0 0
    %1459 = vperm.xlu0 %1458, %v1449
    %v1460 = vpop.permute.xlu0 %1459
    %1463 = vset.pattern.permute.xlu0 0
    %1464 = vperm.xlu0 %1463, %v1450
    %v1465 = vpop.permute.xlu0 %1464
    %1468 = vset.pattern.permute.xlu0 0
    %1469 = vperm.xlu0 %1468, %v1451
    %v1470 = vpop.permute.xlu0 %1469
    %v1472 = vmul.f32 %v107, %v1455
    %v1473 = vmul.f32 %v108, %v1460
    %v1474 = vmul.f32 %v109, %v1465
    %v1475 = vmul.f32 %v110, %v1470
    %v1476 = vsel %vm135, %v1472, 0.0
    %v1477 = vsel %vm135, %v1473, 0.0
    %v1478 = vadd.f32 %v1476, %v1477
    %v1479 = vsel %vm135, %v1474, 0.0
    %v1480 = vadd.f32 %v1478, %v1479
    %v1481 = vsel %vm135, %v1475, 0.0
    %v1482 = vadd.f32 %v1480, %v1481
    %v1483 = vrot.slane %v1482, 4
    %v1484 = vadd.f32 %v1482, %v1483
    %v1485 = vrot.slane %v1484, 2
    %v1486 = vadd.f32 %v1484, %v1485
    %v1487 = vrot.slane %v1486, 1
    %v1488 = vadd.f32 %v1486, %v1487
    %vm1489 = vcmp.gt.f32.partialorder %v1488, %v1455
    %vm1490 = vcmp.gt.f32.partialorder %v1488, %v1460
    %vm1491 = vcmp.gt.f32.partialorder %v1488, %v1465
    %vm1492 = vcmp.gt.f32.partialorder %v1488, %v1470
    %vm1493 = vcmp.eq.f32.partialorder %v1488, %v1455
    %vm1494 = vcmp.eq.f32.partialorder %v1488, %v1460
    %vm1495 = vcmp.eq.f32.partialorder %v1488, %v1465
    %vm1496 = vcmp.eq.f32.partialorder %v1488, %v1470
    %vm1497 = vmand %vm1493, %vm111
    %vm1498 = vmand %vm1494, %vm112
    %vm1499 = vmand %vm1495, %vm113
    %vm1500 = vmand %vm1496, %vm114
    %vm1501 = vmor %vm1489, %vm1497
    %vm1502 = vmor %vm1490, %vm1498
    %vm1503 = vmor %vm1491, %vm1499
    %vm1504 = vmor %vm1492, %vm1500
    %v1505 = vsel %vm1501, %v115, 0.0
    %v1506 = vsel %vm1502, %v116, 0.0
    %v1507 = vsel %vm1503, %v117, 0.0
    %v1508 = vsel %vm1504, %v118, 0.0
    %v1509 = vsel %vm135, %v1505, 0.0
    %1510 = vadd.xlane.f32.xlu0 %v1509
    %v1511 = vpop.xlane.xlu0 %1510
    %v1512 = vsel %vm135, %v1506, 0.0
    %1513 = vadd.xlane.f32.xlu0 %v1512
    %v1514 = vpop.xlane.xlu0 %1513
    %v1515 = vsel %vm135, %v1507, 0.0
    %1516 = vadd.xlane.f32.xlu0 %v1515
    %v1517 = vpop.xlane.xlu0 %1516
    %v1518 = vsel %vm135, %v1508, 0.0
    %1519 = vadd.xlane.f32.xlu0 %v1518
    %v1520 = vpop.xlane.xlu0 %1519
    %vm1521 = vcmp.lt.f32.partialorder %v1511, 6.0
    %vm1522 = vcmp.lt.f32.partialorder %v1514, 6.0
    %vm1523 = vcmp.lt.f32.partialorder %v1517, 6.0
    %vm1524 = vcmp.lt.f32.partialorder %v1520, 6.0
    %vm1525 = vmand %vm1521, %vm1011
    %vm1526 = vmand %vm1522, %vm1012
    %vm1527 = vmand %vm1523, %vm1013
    %vm1528 = vmand %vm1524, %vm1014
    %v1529 = vsel %vm1525, 1.0, 0.0
    %v1530 = vsel %vm1526, 1.0, 0.0
    %v1531 = vsel %vm1527, 1.0, 0.0
    %v1532 = vsel %vm1528, 1.0, 0.0
    %1534 = vset.pattern.permute.xlu0 0
    %1535 = vperm.xlu0 %1534, %v1444
    %v1536 = vpop.permute.xlu0 %1535
    %1539 = vset.pattern.permute.xlu0 0
    %1540 = vperm.xlu0 %1539, %v1445
    %v1541 = vpop.permute.xlu0 %1540
    %1544 = vset.pattern.permute.xlu0 0
    %1545 = vperm.xlu0 %1544, %v1446
    %v1546 = vpop.permute.xlu0 %1545
    %1549 = vset.pattern.permute.xlu0 0
    %1550 = vperm.xlu0 %1549, %v1447
    %v1551 = vpop.permute.xlu0 %1550
    %v1553 = vmul.f32 %v1339, %v1536
    %v1554 = vmul.f32 %v1340, %v1541
    %v1555 = vmul.f32 %v1341, %v1546
    %v1556 = vmul.f32 %v1342, %v1551
    %1558 = vset.pattern.permute.xlu0 0
    %1559 = vperm.xlu0 %1558, %v1529
    %v1560 = vpop.permute.xlu0 %1559
    %1563 = vset.pattern.permute.xlu0 0
    %1564 = vperm.xlu0 %1563, %v1530
    %v1565 = vpop.permute.xlu0 %1564
    %1568 = vset.pattern.permute.xlu0 0
    %1569 = vperm.xlu0 %1568, %v1531
    %v1570 = vpop.permute.xlu0 %1569
    %1573 = vset.pattern.permute.xlu0 0
    %1574 = vperm.xlu0 %1573, %v1532
    %v1575 = vpop.permute.xlu0 %1574
    %v1577 = vmul.f32 %v1553, %v1560
    %v1578 = vmul.f32 %v1554, %v1565
    %v1579 = vmul.f32 %v1555, %v1570
    %v1580 = vmul.f32 %v1556, %v1575
    %v1581 = vsel %vm1525, 1, 0
    %v1582 = vsel %vm1526, 1, 0
    %v1583 = vsel %vm1527, 1, 0
    %v1584 = vsel %vm1528, 1, 0
    %1585 = vset.pattern.permute.xlu0 0
    %1586 = vperm.xlu0 %1585, %v1581
    %v1587 = vpop.permute.xlu0 %1586
    %1588 = vset.pattern.permute.xlu0 0
    %1589 = vperm.xlu0 %1588, %v1582
    %v1590 = vpop.permute.xlu0 %1589
    %1591 = vset.pattern.permute.xlu0 0
    %1592 = vperm.xlu0 %1591, %v1583
    %v1593 = vpop.permute.xlu0 %1592
    %1594 = vset.pattern.permute.xlu0 0
    %1595 = vperm.xlu0 %1594, %v1584
    %v1596 = vpop.permute.xlu0 %1595
    %vm1597 = vcmp.eq.s32.totalorder %v1587, 1
    %vm1598 = vcmp.eq.s32.totalorder %v1590, 1
    %vm1599 = vcmp.eq.s32.totalorder %v1593, 1
    %vm1600 = vcmp.eq.s32.totalorder %v1596, 1
    %v1601 = vsel %vm1597, %v1577, -1e+30
    %v1602 = vsel %vm1598, %v1578, -1e+30
    %v1603 = vsel %vm1599, %v1579, -1e+30
    %v1604 = vsel %vm1600, %v1580, -1e+30
    %v1605 = vmax.f32 %v1601, %v1602
    %v1606 = vrot.slane %v1605, 4
    %v1607 = vmax.f32 %v1605, %v1606
    %v1608 = vrot.slane %v1607, 2
    %v1609 = vmax.f32 %v1607, %v1608
    %v1610 = vrot.slane %v1609, 1
    %v1611 = vmax.f32 %v1609, %v1610
    %v1612 = vadd.f32 %v1577, %v1578
    %v1613 = vrot.slane %v1612, 4
    %v1614 = vadd.f32 %v1612, %v1613
    %v1615 = vrot.slane %v1614, 2
    %v1616 = vadd.f32 %v1614, %v1615
    %v1617 = vrot.slane %v1616, 1
    %v1618 = vadd.f32 %v1616, %v1617
    %v1619 = vmul.f32 %v1618, 0.16666667
    %v1620 = vmax.f32 %v1603, %v1604
    %v1621 = vrot.slane %v1620, 4
    %v1622 = vmax.f32 %v1620, %v1621
    %v1623 = vrot.slane %v1622, 2
    %v1624 = vmax.f32 %v1622, %v1623
    %v1625 = vrot.slane %v1624, 1
    %v1626 = vmax.f32 %v1624, %v1625
    %v1627 = vadd.f32 %v1579, %v1580
    %v1628 = vrot.slane %v1627, 4
    %v1629 = vadd.f32 %v1627, %v1628
    %v1630 = vrot.slane %v1629, 2
    %v1631 = vadd.f32 %v1629, %v1630
    %v1632 = vrot.slane %v1631, 1
    %v1633 = vadd.f32 %v1631, %v1632
    %v1634 = vmul.f32 %v1633, 0.16666667
    %v1637 = vrot.slane %v1626, 7
    %v1638 = vrot.slane %v1634, 7
    %v1641 = vsel %vm637, %v1611, %v1637
    %v1642 = vsel %vm637, %v1619, %v1638
    %v1643 = vadd.f32 %v638, %v1152
    %v1644 = vadd.f32 %v639, %v1153
    %v1645 = vadd.f32 %v1643, %v1641
    %v1646 = vadd.f32 %v1644, %v1642
    %v1647 = vpack.c.bf16 %v1645, %v1645
    %v1648 = vpack.c.bf16 %v1646, %v1646
    %v1649 = vld [vmem:[%s13] sm:$0xff]
    %v1650 = vld [vmem:[%s13 + $0x8] sm:$0xff]
    %v1651 = vld [vmem:[%s13 + $0x10] sm:$0xff]
    %v1652 = vld [vmem:[%s13 + $0x18] sm:$0xff]
    %v1653 = vld [vmem:[%s13 + $0x20] sm:$0xff]
    %v1654 = vld [vmem:[%s13 + $0x28] sm:$0xff]
    %v1655 = vld [vmem:[%s13 + $0x30] sm:$0xff]
    %v1656 = vld [vmem:[%s13 + $0x38] sm:$0xff]
    %v1657 = vld [vmem:[%s13 + $0x40] sm:$0xff]
    %v1658 = vld [vmem:[%s13 + $0x48] sm:$0xff]
    %v1659 = vld [vmem:[%s13 + $0x50] sm:$0xff]
    %v1660 = vld [vmem:[%s13 + $0x58] sm:$0xff]
    %v1661 = vld [vmem:[%s13 + $0x60] sm:$0xff]
    %v1662 = vld [vmem:[%s13 + $0x68] sm:$0xff]
    %v1663 = vld [vmem:[%s13 + $0x70] sm:$0xff]
    %v1664 = vld [vmem:[%s13 + $0x78] sm:$0xff]
    %v1665 = vld [vmem:[%s13 + $0x80] sm:$0xff]
    %v1666 = vld [vmem:[%s13 + $0x88] sm:$0xff]
    %v1667 = vld [vmem:[%s13 + $0x90] sm:$0xff]
    %v1668 = vld [vmem:[%s13 + $0x98] sm:$0xff]
    %v1669 = vld [vmem:[%s13 + $0xa0] sm:$0xff]
    %v1670 = vld [vmem:[%s13 + $0xa8] sm:$0xff]
    %v1671 = vld [vmem:[%s13 + $0xb0] sm:$0xff]
    %v1672 = vld [vmem:[%s13 + $0xb8] sm:$0xff]
    %v1673 = vld [vmem:[%s13 + $0xc0] sm:$0xff]
    %v1674 = vld [vmem:[%s13 + $0xc8] sm:$0xff]
    %v1675 = vld [vmem:[%s13 + $0xd0] sm:$0xff]
    %v1676 = vld [vmem:[%s13 + $0xd8] sm:$0xff]
    %v1677 = vld [vmem:[%s13 + $0xe0] sm:$0xff]
    %v1678 = vld [vmem:[%s13 + $0xe8] sm:$0xff]
    %v1679 = vld [vmem:[%s13 + $0xf0] sm:$0xff]
    %v1680 = vld [vmem:[%s13 + $0xf8] sm:$0xff]
    %v1681 = vpack.c.bf16 %v1650, %v1649
    %v1682 = vpack.c.bf16 %v1652, %v1651
    %v1683 = vpack.c.bf16 %v1654, %v1653
    %v1684 = vpack.c.bf16 %v1656, %v1655
    %v1685 = vpack.c.bf16 %v1658, %v1657
    %v1686 = vpack.c.bf16 %v1660, %v1659
    %v1687 = vpack.c.bf16 %v1662, %v1661
    %v1688 = vpack.c.bf16 %v1664, %v1663
    %v1689 = vpack.c.bf16 %v1666, %v1665
    %v1690 = vpack.c.bf16 %v1668, %v1667
    %v1691 = vpack.c.bf16 %v1670, %v1669
    %v1692 = vpack.c.bf16 %v1672, %v1671
    %v1693 = vpack.c.bf16 %v1674, %v1673
    %v1694 = vpack.c.bf16 %v1676, %v1675
    %v1695 = vpack.c.bf16 %v1678, %v1677
    %v1696 = vpack.c.bf16 %v1680, %v1679
    %v1697 = vld [vmem:[%s14] sm:$0x1]
    %v1699 = vlaneseq
    %v1700 = vshrl.u32 %v1699, 7
    %v1701 = vsub.s32 0, %v1700
    %v1702 = vrot.slane %v1697, %v1701
    %1704 = vmatprep.subr.bf16.mxu0 0
    %1705 = vmatpush1.bf16.msra.mxu0 %v1688
    %1706 = vmatprep.subr.bf16.mxu0 0
    %1707 = vmatpush1.bf16.msra.mxu0 %v1687
    %1708 = vmatprep.subr.bf16.mxu0 0
    %1709 = vmatpush1.bf16.msra.mxu0 %v1686
    %1710 = vmatprep.subr.bf16.mxu0 0
    %1711 = vmatpush1.bf16.msra.mxu0 %v1685
    %1712 = vmatprep.subr.bf16.mxu0 0
    %1713 = vmatpush1.bf16.msra.mxu0 %v1684
    %1714 = vmatprep.subr.bf16.mxu0 0
    %1715 = vmatpush1.bf16.msra.mxu0 %v1683
    %1716 = vmatprep.subr.bf16.mxu0 0
    %1717 = vmatpush1.bf16.msra.mxu0 %v1682
    %1718 = vmatprep.subr.bf16.mxu0 0
    %1719 = vmatpush1.bf16.msra.mxu0 %v1681
    %1720 = vmatprep.subr.bf16.mxu0 0
    %1721 = vmatpush2.bf16.msra.mxu0 %v1696
    %1722 = vmatprep.subr.bf16.mxu0 0
    %1723 = vmatpush2.bf16.msra.mxu0 %v1695
    %1724 = vmatprep.subr.bf16.mxu0 0
    %1725 = vmatpush2.bf16.msra.mxu0 %v1694
    %1726 = vmatprep.subr.bf16.mxu0 0
    %1727 = vmatpush2.bf16.msra.mxu0 %v1693
    %1728 = vmatprep.subr.bf16.mxu0 0
    %1729 = vmatpush2.bf16.msra.mxu0 %v1692
    %1730 = vmatprep.subr.bf16.mxu0 0
    %1731 = vmatpush2.bf16.msra.mxu0 %v1691
    %1732 = vmatprep.subr.bf16.mxu0 0
    %1733 = vmatpush2.bf16.msra.mxu0 %v1690
    %1734 = vmatprep.subr.bf16.mxu0 0
    %1735 = vmatpush2.bf16.msra.mxu0 %v1689
    %1736 = vmatprep.mubr.bf16.mxu0 %v1648
    %1737 = vmatmul.mubr.bf16.gmra.mxu0 %v1647
    %v1738 = vpop.f32.mrf.mxu0
    %v1739 = vadd.f32 %v1702, %v1738
    %v1740 = vpop.f32.mrf.mxu0
    %v1741 = vpop.f32.mrf.mxu0
    %v1742 = vpop.f32.mrf.mxu0
    %1743 = vdwg.mxu0
    %v1744 = vmax.f32 %v1739, 0.0
    %v1745 = vpack.c.bf16 %v1744, %v1744
    %v1746 = vld [vmem:[%s15] sm:$0xff]
    %v1747 = vld [vmem:[%s15 + $0x8] sm:$0xff]
    %v1748 = vld [vmem:[%s15 + $0x10] sm:$0xff]
    %v1749 = vld [vmem:[%s15 + $0x18] sm:$0xff]
    %v1750 = vld [vmem:[%s15 + $0x20] sm:$0xff]
    %v1751 = vld [vmem:[%s15 + $0x28] sm:$0xff]
    %v1752 = vld [vmem:[%s15 + $0x30] sm:$0xff]
    %v1753 = vld [vmem:[%s15 + $0x38] sm:$0xff]
    %v1754 = vld [vmem:[%s15 + $0x40] sm:$0xff]
    %v1755 = vld [vmem:[%s15 + $0x48] sm:$0xff]
    %v1756 = vld [vmem:[%s15 + $0x50] sm:$0xff]
    %v1757 = vld [vmem:[%s15 + $0x58] sm:$0xff]
    %v1758 = vld [vmem:[%s15 + $0x60] sm:$0xff]
    %v1759 = vld [vmem:[%s15 + $0x68] sm:$0xff]
    %v1760 = vld [vmem:[%s15 + $0x70] sm:$0xff]
    %v1761 = vld [vmem:[%s15 + $0x78] sm:$0xff]
    %v1762 = vpack.c.bf16 %v1747, %v1746
    %v1763 = vpack.c.bf16 %v1749, %v1748
    %v1764 = vpack.c.bf16 %v1751, %v1750
    %v1765 = vpack.c.bf16 %v1753, %v1752
    %v1766 = vpack.c.bf16 %v1755, %v1754
    %v1767 = vpack.c.bf16 %v1757, %v1756
    %v1768 = vpack.c.bf16 %v1759, %v1758
    %v1769 = vpack.c.bf16 %v1761, %v1760
    %v1770 = vld [vmem:[%s16] sm:$0x1]
    %v1772 = vlaneseq
    %v1773 = vshrl.u32 %v1772, 7
    %v1774 = vsub.s32 0, %v1773
    %v1775 = vrot.slane %v1770, %v1774
    %1777 = vmatprep.subr.bf16.mxu0 0
    %1778 = vmatpush1.bf16.msra.mxu0 %v1769
    %1779 = vmatprep.subr.bf16.mxu0 0
    %1780 = vmatpush1.bf16.msra.mxu0 %v1768
    %1781 = vmatprep.subr.bf16.mxu0 0
    %1782 = vmatpush1.bf16.msra.mxu0 %v1767
    %1783 = vmatprep.subr.bf16.mxu0 0
    %1784 = vmatpush1.bf16.msra.mxu0 %v1766
    %1785 = vmatprep.subr.bf16.mxu0 0
    %1786 = vmatpush1.bf16.msra.mxu0 %v1765
    %1787 = vmatprep.subr.bf16.mxu0 0
    %1788 = vmatpush1.bf16.msra.mxu0 %v1764
    %1789 = vmatprep.subr.bf16.mxu0 0
    %1790 = vmatpush1.bf16.msra.mxu0 %v1763
    %1791 = vmatprep.subr.bf16.mxu0 0
    %1792 = vmatpush1.bf16.msra.mxu0 %v1762
    %1793 = vmatprep.subr.bf16.mxu0 0
    %1794 = vmatpush2.bf16.msra.mxu0 0
    %1795 = vmatprep.subr.bf16.mxu0 0
    %1796 = vmatpush2.bf16.msra.mxu0 0
    %1797 = vmatprep.subr.bf16.mxu0 0
    %1798 = vmatpush2.bf16.msra.mxu0 0
    %1799 = vmatprep.subr.bf16.mxu0 0
    %1800 = vmatpush2.bf16.msra.mxu0 0
    %1801 = vmatprep.subr.bf16.mxu0 0
    %1802 = vmatpush2.bf16.msra.mxu0 0
    %1803 = vmatprep.subr.bf16.mxu0 0
    %1804 = vmatpush2.bf16.msra.mxu0 0
    %1805 = vmatprep.subr.bf16.mxu0 0
    %1806 = vmatpush2.bf16.msra.mxu0 0
    %1807 = vmatprep.subr.bf16.mxu0 0
    %1808 = vmatpush2.bf16.msra.mxu0 0
    %1809 = vmatprep.mubr.bf16.mxu0 0
    %1810 = vmatmul.mubr.bf16.gmra.mxu0 %v1745
    %v1811 = vpop.f32.mrf.mxu0
    %v1812 = vadd.f32 %v1775, %v1811
    %v1813 = vpop.f32.mrf.mxu0
    %v1814 = vpop.f32.mrf.mxu0
    %v1815 = vpop.f32.mrf.mxu0
    %1816 = vdwg.mxu0
    %v1817 = vmax.f32 %v1812, 0.0
    %v1818 = vpack.c.bf16 %v1817, %v1817
    %v1819 = vld [vmem:[%s17] sm:$0xff]
    %v1820 = vld [vmem:[%s17 + $0x8] sm:$0xff]
    %v1821 = vld [vmem:[%s17 + $0x10] sm:$0xff]
    %v1822 = vld [vmem:[%s17 + $0x18] sm:$0xff]
    %v1823 = vld [vmem:[%s17 + $0x20] sm:$0xff]
    %v1824 = vld [vmem:[%s17 + $0x28] sm:$0xff]
    %v1825 = vld [vmem:[%s17 + $0x30] sm:$0xff]
    %v1826 = vld [vmem:[%s17 + $0x38] sm:$0xff]
    %v1827 = vpack.c.bf16 %v1820, %v1819
    %v1828 = vpack.c.bf16 %v1822, %v1821
    %v1829 = vpack.c.bf16 %v1824, %v1823
    %v1830 = vpack.c.bf16 %v1826, %v1825
    %v1831 = vld [vmem:[%s18] sm:$0x1]
    %v1833 = vlaneseq
    %v1834 = vshrl.u32 %v1833, 7
    %v1835 = vsub.s32 0, %v1834
    %v1836 = vrot.slane %v1831, %v1835
    %vm1838 = vcmask 523264
    %v1840 = vsel %vm1838, %v1818, 0
    %1842 = vmatprep.subr.bf16.mxu0 0
    %1843 = vmatpush1.bf16.msra.mxu0 0
    %1844 = vmatprep.subr.bf16.mxu0 0
    %1845 = vmatpush1.bf16.msra.mxu0 0
    %1846 = vmatprep.subr.bf16.mxu0 0
    %1847 = vmatpush1.bf16.msra.mxu0 0
    %1848 = vmatprep.subr.bf16.mxu0 0
    %1849 = vmatpush1.bf16.msra.mxu0 0
    %1850 = vmatprep.subr.bf16.mxu0 0
    %1851 = vmatpush1.bf16.msra.mxu0 %v1830
    %1852 = vmatprep.subr.bf16.mxu0 0
    %1853 = vmatpush1.bf16.msra.mxu0 %v1829
    %1854 = vmatprep.subr.bf16.mxu0 0
    %1855 = vmatpush1.bf16.msra.mxu0 %v1828
    %1856 = vmatprep.subr.bf16.mxu0 0
    %1857 = vmatpush1.bf16.msra.mxu0 %v1827
    %1858 = vmatprep.subr.bf16.mxu0 0
    %1859 = vmatpush2.bf16.msra.mxu0 0
    %1860 = vmatprep.subr.bf16.mxu0 0
    %1861 = vmatpush2.bf16.msra.mxu0 0
    %1862 = vmatprep.subr.bf16.mxu0 0
    %1863 = vmatpush2.bf16.msra.mxu0 0
    %1864 = vmatprep.subr.bf16.mxu0 0
    %1865 = vmatpush2.bf16.msra.mxu0 0
    %1866 = vmatprep.subr.bf16.mxu0 0
    %1867 = vmatpush2.bf16.msra.mxu0 0
    %1868 = vmatprep.subr.bf16.mxu0 0
    %1869 = vmatpush2.bf16.msra.mxu0 0
    %1870 = vmatprep.subr.bf16.mxu0 0
    %1871 = vmatpush2.bf16.msra.mxu0 0
    %1872 = vmatprep.subr.bf16.mxu0 0
    %1873 = vmatpush2.bf16.msra.mxu0 0
    %1874 = vmatprep.mubr.bf16.mxu0 0
    %1875 = vmatmul.mubr.bf16.gmra.mxu0 %v1840
    %v1876 = vpop.f32.mrf.mxu0
    %v1877 = vadd.f32 %v1836, %v1876
    %v1878 = vpop.f32.mrf.mxu0
    %v1879 = vpop.f32.mrf.mxu0
    %v1880 = vpop.f32.mrf.mxu0
    %1881 = vdwg.mxu0
    %v1882 = vsub.f32 0.0, %v1877
    %v1883 = vmul.f32 %v1882, 1.442695
    %v1884 = vpow.pop %v1883
    %v1885 = vadd.f32 %v1884, 1.0
    %v1886 = vrcp.pop %v1885
    %v1887 = vmul.f32 1.0, %v1886
    %1888 = vst [vmem:[#allocation7] sm:$0x3] %v1887
    // Predicated region
    $region86: #{fwd.1} parent=1 // pred_check
      _
    $region87: #{fwd.1} parent=1 // pred_check_branch
      %1890 = sbr.rel (0) target = $region89
    $region88: #{fwd.1} parent=1 // pred_region
      %s1892 = ssub.s32 32, 32
      %1893 = vsyncadd [#allocation4], %s1892
      %s1895 = sshll.u32 [#allocation7], 4
      %s1896 = int_to_ptr.vmem [resolvable:$true] %s1895
      %1898 = dma.vmem_to_hbm [thread:$0]  %s1896, 32, %s19, [#allocation4]
    $region89: #{fwd.1} parent=1 // pred_fallthru
      _
    // Predicated region
    $region90: #{fwd.1} parent=1 // pred_check
      _
    $region91: #{fwd.1} parent=1 // pred_check_branch
      %1900 = sbr.rel (0) target = $region93
    $region92: #{fwd.1} parent=1 // pred_region
      %1901 = dma.done [#allocation4], 32
    $region93: #{fwd.1} parent=1 // pred_fallthru
      _
    %1902 = vsyncpa [#allocation3], 1
    %1903 = vsyncpa [#allocation6], 1
    %1904 = vsyncpa [#allocation4], 1

</llo_original>
